<compile_context>
chip_gen: v6e
topology: v6e:2x2x1
jax: 0.10.0
libtpu: 0.0.40
codegen_flags: <defaults>
</compile_context>

<pallas_src>
import functools

import jax
import jax.numpy as jnp
from jax.experimental import pallas as pl
from jax.experimental.pallas import tpu as pltpu

EPS = 1e-5
NEG_BIG = -1e30  # mask value for padded log_softmax lanes
VMEM_SPEC = pl.BlockSpec(memory_space=pltpu.MemorySpace.VMEM)


def _round_up(n, m):
    return ((n + m - 1) // m) * m


def _pad2(a, rows, cols):
    a = jnp.asarray(a, jnp.float32)
    return jnp.pad(a, ((0, rows - a.shape[0]), (0, cols - a.shape[1])))


# ---------------------------------------------------------------------------
# Single fused Pallas kernel: entire forward pass, whole arrays in VMEM.
# ---------------------------------------------------------------------------

def _fused_forward_kernel(*refs, n_conv_hidden, n_mlp_hidden, n_out):
    # refs = (a_hat, x, pool, <flat params...>, out)
    a_ref, x_ref, p_ref = refs[0], refs[1], refs[2]
    o_ref = refs[-1]
    prm = refs[3:-1]

    a = a_ref[...]
    h = x_ref[...]

    # conv1: bn1(relu(gcn1(x)))   (BN folded to scale/shift, applied AFTER relu)
    w, b, sc, sh = prm[0:4]
    h = jnp.dot(h, w[...], preferred_element_type=jnp.float32)
    h = jnp.dot(a, h, preferred_element_type=jnp.float32) + b[...]
    h = jnp.maximum(h, 0.0)
    h = h * sc[...] + sh[...]

    # hidden convs: bn(gcn(h))  (no relu, matches the PyTorch module)
    for l in range(n_conv_hidden):
        w, b, sc, sh = prm[4 + 4 * l: 8 + 4 * l]
        t = jnp.dot(h, w[...], preferred_element_type=jnp.float32)
        h = jnp.dot(a, t, preferred_element_type=jnp.float32) + b[...]
        h = h * sc[...] + sh[...]

    # global_add_pool: one-hot segment matrix @ node features (fused, no extra call)
    h = jnp.dot(p_ref[...], h, preferred_element_type=jnp.float32)

    # MLP: bn(relu(fc(h)))  (dropout identity in eval)
    off = 4 + 4 * n_conv_hidden
    for l in range(n_mlp_hidden):
        w, b, sc, sh = prm[off + 4 * l: off + 4 + 4 * l]
        h = jnp.maximum(
            jnp.dot(h, w[...], preferred_element_type=jnp.float32) + b[...], 0.0)
        h = h * sc[...] + sh[...]

    # output layer + log_softmax with padded-lane masking
    wo, bo = prm[-2], prm[-1]
    logits = jnp.dot(h, wo[...], preferred_element_type=jnp.float32) + bo[...]
    lane = jax.lax.broadcasted_iota(jnp.int32, logits.shape, 1)
    logits = jnp.where(lane < n_out, logits, NEG_BIG)
    m = jnp.max(logits, axis=-1, keepdims=True)
    shifted = logits - m
    lse = jnp.log(jnp.sum(jnp.exp(shifted), axis=-1, keepdims=True))
    o_ref[...] = shifted - lse


# ---------------------------------------------------------------------------
# Host-side glue: GCN normalization, pooling matrix, BN folding + padding.
# ---------------------------------------------------------------------------

def build_norm_adj(edge_index, num_nodes, edge_weight=None):
    """A_hat = D^-1/2 (A + I) D^-1/2 with A[dst, src] = edge_weight (PyG flow)."""
    src, dst = edge_index[0], edge_index[1]
    if edge_weight is None:
        edge_weight = jnp.ones(src.shape[0], dtype=jnp.float32)
    a = jnp.zeros((num_nodes, num_nodes), jnp.float32).at[dst, src].add(edge_weight)
    a = a + jnp.eye(num_nodes, dtype=jnp.float32)        # add self loops
    deg = jnp.sum(a, axis=1)
    dinv = jnp.where(deg > 0, jax.lax.rsqrt(deg), 0.0)
    return dinv[:, None] * a * dinv[None, :]


def build_pool_matrix(batch, num_graphs):
    return (batch[None, :] == jnp.arange(num_graphs)[:, None]).astype(jnp.float32)


def _fold_bn(stats):
    gamma, beta, rmean, rvar = stats
    scale = gamma * jax.lax.rsqrt(rvar + EPS)
    shift = beta - rmean * scale
    return scale, shift


def _fold_and_pad_params(params, f_pad, d_pad, o_pad):
    """Flatten params into the order the fused kernel expects, BN-folded + padded."""
    flat = []

    def add_layer(w, b, stats, in_pad, out_pad):
        sc, sh = _fold_bn(stats)
        flat.append(_pad2(w, in_pad, out_pad))
        flat.append(_pad2(b, 1, out_pad))
        flat.append(_pad2(sc, 1, out_pad))
        flat.append(_pad2(sh, 1, out_pad))

    w1, b1 = params["conv1"]
    add_layer(w1, b1, params["bn1"], f_pad, d_pad)
    for (w, b), stats in zip(params["conv_h"], params["bn_conv"]):
        add_layer(w, b, stats, d_pad, d_pad)
    for (w, b), stats in zip(params["mlp_h"], params["bn_mlp"]):
        add_layer(w, b, stats, d_pad, d_pad)
    wo, bo = params["mlp_out"]
    flat.append(_pad2(wo, d_pad, o_pad))
    flat.append(_pad2(bo, 1, o_pad))
    return flat


def molecular_gcn_forward(params, x, edge_index, batch, num_graphs, edge_weight=None):
    n_nodes, n_features = x.shape
    dim = params["conv1"][0].shape[1]
    n_out = params["mlp_out"][0].shape[1]
    n_conv_hidden = len(params["conv_h"])
    n_mlp_hidden = len(params["mlp_h"])

    # Padded sizes: lane (last) dims -> multiples of 128; sublane dims -> 8.
    n_pad = _round_up(n_nodes, 8)
    b_pad = _round_up(num_graphs, 8)
    f_pad = _round_up(n_features, 128)
    d_pad = _round_up(dim, 128)
    o_pad = _round_up(n_out, 128)

    a_hat = _pad2(build_norm_adj(edge_index, n_nodes, edge_weight), n_pad, n_pad)
    pool = _pad2(build_pool_matrix(batch, num_graphs), b_pad, n_pad)
    xp = _pad2(x, n_pad, f_pad)

    flat = _fold_and_pad_params(params, f_pad, d_pad, o_pad)
    inputs = (a_hat, xp, pool, *flat)

    # Advisory cost estimate (helps XLA overlap A_hat construction with the kernel).
    flops = (2 * n_pad * f_pad * d_pad + 2 * n_pad * n_pad * d_pad
             + n_conv_hidden * (2 * n_pad * d_pad * d_pad + 2 * n_pad * n_pad * d_pad)
             + 2 * b_pad * n_pad * d_pad
             + n_mlp_hidden * 2 * b_pad * d_pad * d_pad
             + 2 * b_pad * d_pad * o_pad)
    bytes_accessed = sum(int(a.size) * 4 for a in inputs) + b_pad * o_pad * 4
    transcendentals = b_pad * o_pad + b_pad

    kernel = functools.partial(
        _fused_forward_kernel,
        n_conv_hidden=n_conv_hidden,
        n_mlp_hidden=n_mlp_hidden,
        n_out=n_out,
    )
    out = pl.pallas_call(
        kernel,
        out_shape=jax.ShapeDtypeStruct((b_pad, o_pad), jnp.float32),
        in_specs=[VMEM_SPEC] * len(inputs),
        out_specs=VMEM_SPEC,
        cost_estimate=pl.CostEstimate(
            flops=flops,
            transcendentals=transcendentals,
            bytes_accessed=bytes_accessed,
        ),
    )(*inputs)

    return out[:num_graphs, :n_out]


# ---------------------------------------------------------------------------
# Parameter init + pure-JAX reference (for correctness check only)
# ---------------------------------------------------------------------------

def init_params(key, n_features, dim, n_conv_hidden, n_mlp_hidden, n_out=1000):
    def dense(k, fan_in, fan_out):
        kw, kb = jax.random.split(k)
        w = jax.random.normal(kw, (fan_in, fan_out), jnp.float32) * (1.0 / jnp.sqrt(fan_in))
        b = jax.random.normal(kb, (1, fan_out), jnp.float32) * 0.01
        return w, b

    def bn(k, d):
        kg, kb, km, kv = jax.random.split(k, 4)
        gamma = 1.0 + 0.1 * jax.random.normal(kg, (1, d), jnp.float32)
        beta = 0.1 * jax.random.normal(kb, (1, d), jnp.float32)
        rmean = 0.1 * jax.random.normal(km, (1, d), jnp.float32)
        rvar = 1.0 + 0.1 * jax.random.uniform(kv, (1, d), jnp.float32)
        return gamma, beta, rmean, rvar

    keys = jax.random.split(key, 3 + 2 * n_conv_hidden + 2 * n_mlp_hidden)
    ki = iter(keys)
    params = {}
    params["conv1"] = dense(next(ki), n_features, dim)
    params["bn1"] = bn(next(ki), dim)
    params["conv_h"] = [dense(next(ki), dim, dim) for _ in range(n_conv_hidden)]
    params["bn_conv"] = [bn(next(ki), dim) for _ in range(n_conv_hidden)]
    params["mlp_h"] = [dense(next(ki), dim, dim) for _ in range(n_mlp_hidden)]
    params["bn_mlp"] = [bn(next(ki), dim) for _ in range(n_mlp_hidden)]
    params["mlp_out"] = dense(next(ki), dim, n_out)
    return params


def reference_forward(params, x, edge_index, batch, num_graphs, edge_weight=None):
    a_hat = build_norm_adj(edge_index, x.shape[0], edge_weight)
    p = build_pool_matrix(batch, num_graphs)

    def bn_eval(h, stats):
        g, be, rm, rv = stats
        return g * (h - rm) * jax.lax.rsqrt(rv + EPS) + be

    w1, b1 = params["conv1"]
    h = bn_eval(jnp.maximum(a_hat @ (x @ w1) + b1, 0.0), params["bn1"])
    for (w, b), stats in zip(params["conv_h"], params["bn_conv"]):
        h = bn_eval(a_hat @ (h @ w) + b, stats)
    h = p @ h
    for (w, b), stats in zip(params["mlp_h"], params["bn_mlp"]):
        h = bn_eval(jnp.maximum(h @ w + b, 0.0), stats)
    wo, bo = params["mlp_out"]
    return jax.nn.log_softmax(h @ wo + bo, axis=-1)


if __name__ == "__main__":
    # small, deterministic example
    dim, n_conv_hidden, n_mlp_hidden = 32, 2, 2
    n_features, n_out = 75, 1000
    nodes_per_graph, num_graphs = 6, 2
    n_nodes = nodes_per_graph * num_graphs

    key = jax.random.PRNGKey(0)
    kx, kp = jax.random.split(key)

    x = jax.random.normal(kx, (n_nodes, n_features), jnp.float32)

    # ring graph inside each molecule, both directions (undirected)
    srcs, dsts = [], []
    for g in range(num_graphs):
        off = g * nodes_per_graph
        s = jnp.arange(nodes_per_graph) + off
        d = (jnp.arange(nodes_per_graph) + 1) % nodes_per_graph + off
        srcs += [s, d]
        dsts += [d, s]
    edge_index = jnp.stack([jnp.concatenate(srcs), jnp.concatenate(dsts)]).astype(jnp.int32)
    batch = jnp.repeat(jnp.arange(num_graphs, dtype=jnp.int32), nodes_per_graph)

    params = init_params(kp, n_features, dim, n_conv_hidden, n_mlp_hidden, n_out)

    out = molecular_gcn_forward(params, x, edge_index, batch, num_graphs)
    out = jax.block_until_ready(out)

    ref = jax.block_until_ready(
        reference_forward(params, x, edge_index, batch, num_graphs))
    assert out.shape == (num_graphs, n_out)
    assert jnp.allclose(out, ref, rtol=1e-3, atol=1e-3)

    print("KERNEL_OK")
</pallas_src>

<mosaic_0001>
module attributes {stable_mosaic.version = 11 : i64} {
  func.func @_fused_forward_kernel(%arg0: memref<16x16xf32, #tpu.memory_space<vmem>>, %arg1: memref<16x128xf32, #tpu.memory_space<vmem>>, %arg2: memref<8x16xf32, #tpu.memory_space<vmem>>, %arg3: memref<128x128xf32, #tpu.memory_space<vmem>>, %arg4: memref<1x128xf32, #tpu.memory_space<vmem>>, %arg5: memref<1x128xf32, #tpu.memory_space<vmem>>, %arg6: memref<1x128xf32, #tpu.memory_space<vmem>>, %arg7: memref<128x128xf32, #tpu.memory_space<vmem>>, %arg8: memref<1x128xf32, #tpu.memory_space<vmem>>, %arg9: memref<1x128xf32, #tpu.memory_space<vmem>>, %arg10: memref<1x128xf32, #tpu.memory_space<vmem>>, %arg11: memref<128x128xf32, #tpu.memory_space<vmem>>, %arg12: memref<1x128xf32, #tpu.memory_space<vmem>>, %arg13: memref<1x128xf32, #tpu.memory_space<vmem>>, %arg14: memref<1x128xf32, #tpu.memory_space<vmem>>, %arg15: memref<128x128xf32, #tpu.memory_space<vmem>>, %arg16: memref<1x128xf32, #tpu.memory_space<vmem>>, %arg17: memref<1x128xf32, #tpu.memory_space<vmem>>, %arg18: memref<1x128xf32, #tpu.memory_space<vmem>>, %arg19: memref<128x128xf32, #tpu.memory_space<vmem>>, %arg20: memref<1x128xf32, #tpu.memory_space<vmem>>, %arg21: memref<1x128xf32, #tpu.memory_space<vmem>>, %arg22: memref<1x128xf32, #tpu.memory_space<vmem>>, %arg23: memref<128x1024xf32, #tpu.memory_space<vmem>>, %arg24: memref<1x1024xf32, #tpu.memory_space<vmem>>, %arg25: memref<8x1024xf32, #tpu.memory_space<vmem>>) attributes {dimension_semantics = [], scalar_prefetch = 0 : i64, scratch_operands = 0 : i64, tpu.core_type = #tpu.core_type<tc>} {
    %c0 = arith.constant 0 : index
    %c0_0 = arith.constant 0 : index
    %0 = vector.load %arg0[%c0, %c0_0] : memref<16x16xf32, #tpu.memory_space<vmem>>, vector<16x16xf32>
    %c0_1 = arith.constant 0 : index
    %c0_2 = arith.constant 0 : index
    %1 = vector.load %arg1[%c0_1, %c0_2] : memref<16x128xf32, #tpu.memory_space<vmem>>, vector<16x128xf32>
    %c0_3 = arith.constant 0 : index
    %c0_4 = arith.constant 0 : index
    %2 = vector.load %arg3[%c0_3, %c0_4] : memref<128x128xf32, #tpu.memory_space<vmem>>, vector<128x128xf32>
    %cst = arith.constant dense<0.000000e+00> : vector<16x128xf32>
    %3 = tpu.matmul %1, %2, %cst {dimension_numbers = #tpu.dot_dimension_numbers<[1], [0], [0], [1], [0, 0, 1, 1], [], []>} : vector<16x128xf32>, vector<128x128xf32>, vector<16x128xf32> -> vector<16x128xf32>
    %cst_5 = arith.constant dense<0.000000e+00> : vector<16x128xf32>
    %4 = tpu.matmul %0, %3, %cst_5 {dimension_numbers = #tpu.dot_dimension_numbers<[1], [0], [0], [1], [0, 0, 1, 1], [], []>} : vector<16x16xf32>, vector<16x128xf32>, vector<16x128xf32> -> vector<16x128xf32>
    %c0_6 = arith.constant 0 : index
    %c0_7 = arith.constant 0 : index
    %5 = vector.load %arg4[%c0_6, %c0_7] : memref<1x128xf32, #tpu.memory_space<vmem>>, vector<1x128xf32>
    %6 = vector.broadcast %5 : vector<1x128xf32> to vector<16x128xf32>
    %7 = arith.addf %4, %6 : vector<16x128xf32>
    %cst_8 = arith.constant 0.000000e+00 : f32
    %8 = vector.broadcast %cst_8 : f32 to vector<16x128xf32>
    %9 = arith.maximumf %7, %8 : vector<16x128xf32>
    %c0_9 = arith.constant 0 : index
    %c0_10 = arith.constant 0 : index
    %10 = vector.load %arg5[%c0_9, %c0_10] : memref<1x128xf32, #tpu.memory_space<vmem>>, vector<1x128xf32>
    %11 = vector.broadcast %10 : vector<1x128xf32> to vector<16x128xf32>
    %12 = arith.mulf %9, %11 : vector<16x128xf32>
    %c0_11 = arith.constant 0 : index
    %c0_12 = arith.constant 0 : index
    %13 = vector.load %arg6[%c0_11, %c0_12] : memref<1x128xf32, #tpu.memory_space<vmem>>, vector<1x128xf32>
    %14 = vector.broadcast %13 : vector<1x128xf32> to vector<16x128xf32>
    %15 = arith.addf %12, %14 : vector<16x128xf32>
    %c0_13 = arith.constant 0 : index
    %c0_14 = arith.constant 0 : index
    %16 = vector.load %arg7[%c0_13, %c0_14] : memref<128x128xf32, #tpu.memory_space<vmem>>, vector<128x128xf32>
    %cst_15 = arith.constant dense<0.000000e+00> : vector<16x128xf32>
    %17 = tpu.matmul %15, %16, %cst_15 {dimension_numbers = #tpu.dot_dimension_numbers<[1], [0], [0], [1], [0, 0, 1, 1], [], []>} : vector<16x128xf32>, vector<128x128xf32>, vector<16x128xf32> -> vector<16x128xf32>
    %cst_16 = arith.constant dense<0.000000e+00> : vector<16x128xf32>
    %18 = tpu.matmul %0, %17, %cst_16 {dimension_numbers = #tpu.dot_dimension_numbers<[1], [0], [0], [1], [0, 0, 1, 1], [], []>} : vector<16x16xf32>, vector<16x128xf32>, vector<16x128xf32> -> vector<16x128xf32>
    %c0_17 = arith.constant 0 : index
    %c0_18 = arith.constant 0 : index
    %19 = vector.load %arg8[%c0_17, %c0_18] : memref<1x128xf32, #tpu.memory_space<vmem>>, vector<1x128xf32>
    %20 = vector.broadcast %19 : vector<1x128xf32> to vector<16x128xf32>
    %21 = arith.addf %18, %20 : vector<16x128xf32>
    %c0_19 = arith.constant 0 : index
    %c0_20 = arith.constant 0 : index
    %22 = vector.load %arg9[%c0_19, %c0_20] : memref<1x128xf32, #tpu.memory_space<vmem>>, vector<1x128xf32>
    %23 = vector.broadcast %22 : vector<1x128xf32> to vector<16x128xf32>
    %24 = arith.mulf %21, %23 : vector<16x128xf32>
    %c0_21 = arith.constant 0 : index
    %c0_22 = arith.constant 0 : index
    %25 = vector.load %arg10[%c0_21, %c0_22] : memref<1x128xf32, #tpu.memory_space<vmem>>, vector<1x128xf32>
    %26 = vector.broadcast %25 : vector<1x128xf32> to vector<16x128xf32>
    %27 = arith.addf %24, %26 : vector<16x128xf32>
    %c0_23 = arith.constant 0 : index
    %c0_24 = arith.constant 0 : index
    %28 = vector.load %arg11[%c0_23, %c0_24] : memref<128x128xf32, #tpu.memory_space<vmem>>, vector<128x128xf32>
    %cst_25 = arith.constant dense<0.000000e+00> : vector<16x128xf32>
    %29 = tpu.matmul %27, %28, %cst_25 {dimension_numbers = #tpu.dot_dimension_numbers<[1], [0], [0], [1], [0, 0, 1, 1], [], []>} : vector<16x128xf32>, vector<128x128xf32>, vector<16x128xf32> -> vector<16x128xf32>
    %cst_26 = arith.constant dense<0.000000e+00> : vector<16x128xf32>
    %30 = tpu.matmul %0, %29, %cst_26 {dimension_numbers = #tpu.dot_dimension_numbers<[1], [0], [0], [1], [0, 0, 1, 1], [], []>} : vector<16x16xf32>, vector<16x128xf32>, vector<16x128xf32> -> vector<16x128xf32>
    %c0_27 = arith.constant 0 : index
    %c0_28 = arith.constant 0 : index
    %31 = vector.load %arg12[%c0_27, %c0_28] : memref<1x128xf32, #tpu.memory_space<vmem>>, vector<1x128xf32>
    %32 = vector.broadcast %31 : vector<1x128xf32> to vector<16x128xf32>
    %33 = arith.addf %30, %32 : vector<16x128xf32>
    %c0_29 = arith.constant 0 : index
    %c0_30 = arith.constant 0 : index
    %34 = vector.load %arg13[%c0_29, %c0_30] : memref<1x128xf32, #tpu.memory_space<vmem>>, vector<1x128xf32>
    %35 = vector.broadcast %34 : vector<1x128xf32> to vector<16x128xf32>
    %36 = arith.mulf %33, %35 : vector<16x128xf32>
    %c0_31 = arith.constant 0 : index
    %c0_32 = arith.constant 0 : index
    %37 = vector.load %arg14[%c0_31, %c0_32] : memref<1x128xf32, #tpu.memory_space<vmem>>, vector<1x128xf32>
    %38 = vector.broadcast %37 : vector<1x128xf32> to vector<16x128xf32>
    %39 = arith.addf %36, %38 : vector<16x128xf32>
    %c0_33 = arith.constant 0 : index
    %c0_34 = arith.constant 0 : index
    %40 = vector.load %arg2[%c0_33, %c0_34] : memref<8x16xf32, #tpu.memory_space<vmem>>, vector<8x16xf32>
    %cst_35 = arith.constant dense<0.000000e+00> : vector<8x128xf32>
    %41 = tpu.matmul %40, %39, %cst_35 {dimension_numbers = #tpu.dot_dimension_numbers<[1], [0], [0], [1], [0, 0, 1, 1], [], []>} : vector<8x16xf32>, vector<16x128xf32>, vector<8x128xf32> -> vector<8x128xf32>
    %c0_36 = arith.constant 0 : index
    %c0_37 = arith.constant 0 : index
    %42 = vector.load %arg15[%c0_36, %c0_37] : memref<128x128xf32, #tpu.memory_space<vmem>>, vector<128x128xf32>
    %cst_38 = arith.constant dense<0.000000e+00> : vector<8x128xf32>
    %43 = tpu.matmul %41, %42, %cst_38 {dimension_numbers = #tpu.dot_dimension_numbers<[1], [0], [0], [1], [0, 0, 1, 1], [], []>} : vector<8x128xf32>, vector<128x128xf32>, vector<8x128xf32> -> vector<8x128xf32>
    %c0_39 = arith.constant 0 : index
    %c0_40 = arith.constant 0 : index
    %44 = vector.load %arg16[%c0_39, %c0_40] : memref<1x128xf32, #tpu.memory_space<vmem>>, vector<1x128xf32>
    %45 = vector.broadcast %44 : vector<1x128xf32> to vector<8x128xf32>
    %46 = arith.addf %43, %45 : vector<8x128xf32>
    %cst_41 = arith.constant 0.000000e+00 : f32
    %47 = vector.broadcast %cst_41 : f32 to vector<8x128xf32>
    %48 = arith.maximumf %46, %47 : vector<8x128xf32>
    %c0_42 = arith.constant 0 : index
    %c0_43 = arith.constant 0 : index
    %49 = vector.load %arg17[%c0_42, %c0_43] : memref<1x128xf32, #tpu.memory_space<vmem>>, vector<1x128xf32>
    %50 = vector.broadcast %49 : vector<1x128xf32> to vector<8x128xf32>
    %51 = arith.mulf %48, %50 : vector<8x128xf32>
    %c0_44 = arith.constant 0 : index
    %c0_45 = arith.constant 0 : index
    %52 = vector.load %arg18[%c0_44, %c0_45] : memref<1x128xf32, #tpu.memory_space<vmem>>, vector<1x128xf32>
    %53 = vector.broadcast %52 : vector<1x128xf32> to vector<8x128xf32>
    %54 = arith.addf %51, %53 : vector<8x128xf32>
    %c0_46 = arith.constant 0 : index
    %c0_47 = arith.constant 0 : index
    %55 = vector.load %arg19[%c0_46, %c0_47] : memref<128x128xf32, #tpu.memory_space<vmem>>, vector<128x128xf32>
    %cst_48 = arith.constant dense<0.000000e+00> : vector<8x128xf32>
    %56 = tpu.matmul %54, %55, %cst_48 {dimension_numbers = #tpu.dot_dimension_numbers<[1], [0], [0], [1], [0, 0, 1, 1], [], []>} : vector<8x128xf32>, vector<128x128xf32>, vector<8x128xf32> -> vector<8x128xf32>
    %c0_49 = arith.constant 0 : index
    %c0_50 = arith.constant 0 : index
    %57 = vector.load %arg20[%c0_49, %c0_50] : memref<1x128xf32, #tpu.memory_space<vmem>>, vector<1x128xf32>
    %58 = vector.broadcast %57 : vector<1x128xf32> to vector<8x128xf32>
    %59 = arith.addf %56, %58 : vector<8x128xf32>
    %cst_51 = arith.constant 0.000000e+00 : f32
    %60 = vector.broadcast %cst_51 : f32 to vector<8x128xf32>
    %61 = arith.maximumf %59, %60 : vector<8x128xf32>
    %c0_52 = arith.constant 0 : index
    %c0_53 = arith.constant 0 : index
    %62 = vector.load %arg21[%c0_52, %c0_53] : memref<1x128xf32, #tpu.memory_space<vmem>>, vector<1x128xf32>
    %63 = vector.broadcast %62 : vector<1x128xf32> to vector<8x128xf32>
    %64 = arith.mulf %61, %63 : vector<8x128xf32>
    %c0_54 = arith.constant 0 : index
    %c0_55 = arith.constant 0 : index
    %65 = vector.load %arg22[%c0_54, %c0_55] : memref<1x128xf32, #tpu.memory_space<vmem>>, vector<1x128xf32>
    %66 = vector.broadcast %65 : vector<1x128xf32> to vector<8x128xf32>
    %67 = arith.addf %64, %66 : vector<8x128xf32>
    %c0_56 = arith.constant 0 : index
    %c0_57 = arith.constant 0 : index
    %68 = vector.load %arg23[%c0_56, %c0_57] : memref<128x1024xf32, #tpu.memory_space<vmem>>, vector<128x1024xf32>
    %cst_58 = arith.constant dense<0.000000e+00> : vector<8x1024xf32>
    %69 = tpu.matmul %67, %68, %cst_58 {dimension_numbers = #tpu.dot_dimension_numbers<[1], [0], [0], [1], [0, 0, 1, 1], [], []>} : vector<8x128xf32>, vector<128x1024xf32>, vector<8x1024xf32> -> vector<8x1024xf32>
    %c0_59 = arith.constant 0 : index
    %c0_60 = arith.constant 0 : index
    %70 = vector.load %arg24[%c0_59, %c0_60] : memref<1x1024xf32, #tpu.memory_space<vmem>>, vector<1x1024xf32>
    %71 = vector.broadcast %70 : vector<1x1024xf32> to vector<8x1024xf32>
    %72 = arith.addf %69, %71 : vector<8x1024xf32>
    %73 = tpu.iota {dimensions = array<i32: 1>} : vector<8x1024xi32>
    %c1000_i32 = arith.constant 1000 : i32
    %74 = vector.broadcast %c1000_i32 : i32 to vector<8x1024xi32>
    %75 = arith.cmpi slt, %73, %74 : vector<8x1024xi32>
    %cst_61 = arith.constant -1.000000e+30 : f32
    %76 = vector.broadcast %cst_61 : f32 to vector<8x1024xf32>
    %77 = arith.select %75, %72, %76 : vector<8x1024xi1>, vector<8x1024xf32>
    %cst_62 = arith.constant dense<0xFF800000> : vector<8xf32>
    %78 = vector.multi_reduction <maximumf>, %77, %cst_62 [1] : vector<8x1024xf32> to vector<8xf32>
    %79 = vector.shape_cast %78 : vector<8xf32> to vector<8x1xf32>
    %80 = vector.broadcast %79 : vector<8x1xf32> to vector<8x1024xf32>
    %81 = arith.subf %77, %80 : vector<8x1024xf32>
    %82 = math.exp %81 : vector<8x1024xf32>
    %cst_63 = arith.constant dense<0.000000e+00> : vector<8xf32>
    %83 = vector.multi_reduction <add>, %82, %cst_63 [1] : vector<8x1024xf32> to vector<8xf32>
    %84 = vector.shape_cast %83 : vector<8xf32> to vector<8x1xf32>
    %85 = math.log %84 : vector<8x1xf32>
    %86 = vector.broadcast %85 : vector<8x1xf32> to vector<8x1024xf32>
    %87 = arith.subf %81, %86 : vector<8x1024xf32>
    %c0_64 = arith.constant 0 : index
    %c0_65 = arith.constant 0 : index
    %88 = vector.load %arg25[%c0_64, %c0_65] : memref<8x1024xf32, #tpu.memory_space<vmem>>, vector<8x1024xf32>
    tpu.vector_store %arg25[%c0_64, %c0_65], %87 {strides = array<i32>} : memref<8x1024xf32, #tpu.memory_space<vmem>>, vector<8x1024xf32>,
    return
  }
}

</mosaic_0001>

<llo_original>
// kernel: tpu_custom_call.1
$region0: #{tpu_custom_call.1}
  #allocation0 [shape = 'u32[]', space=smem, size = 0x4, offset = 0x4, fixed_abs, tag = 'smem constant byte address 0x4 - core index']
  #allocation1 [shape = 'u32[144,128]{1,0:T(1,128)}', space=vmem, size = 0x12000, scoped, tag = 'internal scratch']
  %s0 = inlined_call_operand.hbm [shape: f32[16,16], index: 0, kind: input, shape index: {}]
  %s1 = inlined_call_operand.hbm [shape: f32[16,128], index: 1, kind: input, shape index: {}]
  %s2 = inlined_call_operand.hbm [shape: f32[8,16], index: 2, kind: input, shape index: {}]
  %s3 = inlined_call_operand.hbm [shape: f32[128,128], index: 3, kind: input, shape index: {}]
  %s4 = inlined_call_operand.vmem [shape: f32[1,128], index: 4, kind: input, shape index: {}]
  %s5 = inlined_call_operand.vmem [shape: f32[1,128], index: 5, kind: input, shape index: {}]
  %s6 = inlined_call_operand.vmem [shape: f32[1,128], index: 6, kind: input, shape index: {}]
  %s7 = inlined_call_operand.hbm [shape: f32[128,128], index: 7, kind: input, shape index: {}]
  %s8 = inlined_call_operand.vmem [shape: f32[1,128], index: 8, kind: input, shape index: {}]
  %s9 = inlined_call_operand.vmem [shape: f32[1,128], index: 9, kind: input, shape index: {}]
  %s10 = inlined_call_operand.vmem [shape: f32[1,128], index: 10, kind: input, shape index: {}]
  %s11 = inlined_call_operand.hbm [shape: f32[128,128], index: 11, kind: input, shape index: {}]
  %s12 = inlined_call_operand.vmem [shape: f32[1,128], index: 12, kind: input, shape index: {}]
  %s13 = inlined_call_operand.vmem [shape: f32[1,128], index: 13, kind: input, shape index: {}]
  %s14 = inlined_call_operand.vmem [shape: f32[1,128], index: 14, kind: input, shape index: {}]
  %s15 = inlined_call_operand.hbm [shape: f32[128,128], index: 15, kind: input, shape index: {}]
  %s16 = inlined_call_operand.vmem [shape: f32[1,128], index: 16, kind: input, shape index: {}]
  %s17 = inlined_call_operand.vmem [shape: f32[1,128], index: 17, kind: input, shape index: {}]
  %s18 = inlined_call_operand.vmem [shape: f32[1,128], index: 18, kind: input, shape index: {}]
  %s19 = inlined_call_operand.hbm [shape: f32[128,128], index: 19, kind: input, shape index: {}]
  %s20 = inlined_call_operand.vmem [shape: f32[1,128], index: 20, kind: input, shape index: {}]
  %s21 = inlined_call_operand.vmem [shape: f32[1,128], index: 21, kind: input, shape index: {}]
  %s22 = inlined_call_operand.vmem [shape: f32[1,128], index: 22, kind: input, shape index: {}]
  %s23 = inlined_call_operand.hbm [shape: f32[128,1024], index: 23, kind: input, shape index: {}]
  %s24 = inlined_call_operand.vmem [shape: f32[1,1024], index: 24, kind: input, shape index: {}]
  %s25 = inlined_call_operand.hbm [shape: f32[8,1024], index: 25, kind: output, shape index: {}]
  %s26 = sld [smem:[#allocation0]]
  $region146: #{tpu_custom_call.1} parent=0
    _
  %s28 = ssub.s32 1, %s26
  %s29 = scalar_select 0, %s28, %s26
  $region1: #{tpu_custom_call.1} parent=0
    #allocation2 [shape = 'u8[8192]{0}', space=vmem, size = 0x2000, scoped, tag = 'input window, operand 0, single buffered']
    #allocation3 [shape = 's32[1]{0}', space=sflag, size = 0x4, scoped, tag = 'scoped memory for tpu_custom_call.1']
    #allocation4 [shape = 's32[1]{0}', space=sflag, size = 0x4, scoped, tag = 'scoped memory for tpu_custom_call.1']
    #allocation5 [shape = 'u8[8192]{0}', space=vmem, size = 0x2000, scoped, tag = 'input window, operand 1, single buffered']
    #allocation6 [shape = 's32[1]{0}', space=sflag, size = 0x4, scoped, tag = 'scoped memory for tpu_custom_call.1']
    #allocation7 [shape = 'u8[4096]{0}', space=vmem, size = 0x1000, scoped, tag = 'input window, operand 2, single buffered']
    #allocation8 [shape = 'u8[65536]{0}', space=vmem, size = 0x10000, scoped, tag = 'input window, operand 3, single buffered']
    #allocation9 [shape = 's32[1]{0}', space=sflag, size = 0x4, scoped, tag = 'scoped memory for tpu_custom_call.1']
    #allocation10 [shape = 'u8[65536]{0}', space=vmem, size = 0x10000, scoped, tag = 'input window, operand 7, single buffered']
    #allocation11 [shape = 'u8[65536]{0}', space=vmem, size = 0x10000, scoped, tag = 'input window, operand 11, single buffered']
    #allocation12 [shape = 's32[1]{0}', space=sflag, size = 0x4, scoped, tag = 'scoped memory for tpu_custom_call.1']
    #allocation13 [shape = 'u8[65536]{0}', space=vmem, size = 0x10000, scoped, tag = 'input window, operand 15, single buffered']
    #allocation14 [shape = 'u8[65536]{0}', space=vmem, size = 0x10000, scoped, tag = 'input window, operand 19, single buffered']
    #allocation15 [shape = 's32[1]{0}', space=sflag, size = 0x4, scoped, tag = 'scoped memory for tpu_custom_call.1']
    #allocation16 [shape = 'u8[524288]{0}', space=vmem, size = 0x80000, scoped, tag = 'input window, operand 23, single buffered']
    #allocation17 [shape = 'u8[32768]{0}', space=vmem, size = 0x8000, scoped, tag = 'output window, operand 0, single buffered']
    %30 = vsyncpa [#allocation3], 0
    %31 = vsyncpa [#allocation6], 0
    %32 = vsyncpa [#allocation9], 0
    %33 = vsyncpa [#allocation12], 0
    %34 = vsyncpa [#allocation15], 0
    %35 = vsyncpa [#allocation4], 0
    // Predicated region
    $region2: #{tpu_custom_call.1} parent=1 // pred_check
      _
    $region3: #{tpu_custom_call.1} parent=1 // pred_check_branch
      %37 = sbr.rel (0) target = $region5
    $region4: #{tpu_custom_call.1} parent=1 // pred_region
      %s39 = ssub.s32 256, 256
      %40 = vsyncadd [#allocation3], %s39
      %s41 = sshll.u32 [#allocation2], 4
      %s42 = int_to_ptr.vmem [resolvable:$true] %s41
      %47 = dma.hbm_to_vmem [thread:$0]  %s0, 256, %s42, [#allocation3], 128, 128, 8
    $region5: #{tpu_custom_call.1} parent=1 // pred_fallthru
      _
    // Predicated region
    $region6: #{tpu_custom_call.1} parent=1 // pred_check
      _
    $region7: #{tpu_custom_call.1} parent=1 // pred_check_branch
      %49 = sbr.rel (0) target = $region9
    $region8: #{tpu_custom_call.1} parent=1 // pred_region
      %s51 = ssub.s32 256, 256
      %52 = vsyncadd [#allocation6], %s51
      %s53 = sshll.u32 [#allocation5], 4
      %s54 = int_to_ptr.vmem [resolvable:$true] %s53
      %59 = dma.hbm_to_vmem [thread:$0]  %s1, 256, %s54, [#allocation6], 128, 128, 8
    $region9: #{tpu_custom_call.1} parent=1 // pred_fallthru
      _
    // Predicated region
    $region10: #{tpu_custom_call.1} parent=1 // pred_check
      _
    $region11: #{tpu_custom_call.1} parent=1 // pred_check_branch
      %61 = sbr.rel (0) target = $region13
    $region12: #{tpu_custom_call.1} parent=1 // pred_region
      %s63 = ssub.s32 128, 128
      %64 = vsyncadd [#allocation6], %s63
      %s66 = sshll.u32 [#allocation7], 4
      %s67 = int_to_ptr.vmem [resolvable:$true] %s66
      %69 = dma.hbm_to_vmem [thread:$0]  %s2, 128, %s67, [#allocation6]
    $region13: #{tpu_custom_call.1} parent=1 // pred_fallthru
      _
    // Predicated region
    $region14: #{tpu_custom_call.1} parent=1 // pred_check
      _
    $region15: #{tpu_custom_call.1} parent=1 // pred_check_branch
      %71 = sbr.rel (0) target = $region17
    $region16: #{tpu_custom_call.1} parent=1 // pred_region
      %s73 = ssub.s32 2048, 2048
      %74 = vsyncadd [#allocation9], %s73
      %s75 = sshll.u32 [#allocation8], 4
      %s76 = int_to_ptr.vmem [resolvable:$true] %s75
      %81 = dma.hbm_to_vmem [thread:$0]  %s3, 2048, %s76, [#allocation9], 128, 128, 8
    $region17: #{tpu_custom_call.1} parent=1 // pred_fallthru
      _
    // Predicated region
    $region18: #{tpu_custom_call.1} parent=1 // pred_check
      _
    $region19: #{tpu_custom_call.1} parent=1 // pred_check_branch
      %83 = sbr.rel (0) target = $region21
    $region20: #{tpu_custom_call.1} parent=1 // pred_region
      _
    $region21: #{tpu_custom_call.1} parent=1 // pred_fallthru
      _
    // Predicated region
    $region22: #{tpu_custom_call.1} parent=1 // pred_check
      _
    $region23: #{tpu_custom_call.1} parent=1 // pred_check_branch
      %85 = sbr.rel (0) target = $region25
    $region24: #{tpu_custom_call.1} parent=1 // pred_region
      _
    $region25: #{tpu_custom_call.1} parent=1 // pred_fallthru
      _
    // Predicated region
    $region26: #{tpu_custom_call.1} parent=1 // pred_check
      _
    $region27: #{tpu_custom_call.1} parent=1 // pred_check_branch
      %87 = sbr.rel (0) target = $region29
    $region28: #{tpu_custom_call.1} parent=1 // pred_region
      _
    $region29: #{tpu_custom_call.1} parent=1 // pred_fallthru
      _
    // Predicated region
    $region30: #{tpu_custom_call.1} parent=1 // pred_check
      _
    $region31: #{tpu_custom_call.1} parent=1 // pred_check_branch
      %89 = sbr.rel (0) target = $region33
    $region32: #{tpu_custom_call.1} parent=1 // pred_region
      %s91 = ssub.s32 2048, 2048
      %92 = vsyncadd [#allocation9], %s91
      %s93 = sshll.u32 [#allocation10], 4
      %s94 = int_to_ptr.vmem [resolvable:$true] %s93
      %99 = dma.hbm_to_vmem [thread:$0]  %s7, 2048, %s94, [#allocation9], 128, 128, 8
    $region33: #{tpu_custom_call.1} parent=1 // pred_fallthru
      _
    // Predicated region
    $region34: #{tpu_custom_call.1} parent=1 // pred_check
      _
    $region35: #{tpu_custom_call.1} parent=1 // pred_check_branch
      %101 = sbr.rel (0) target = $region37
    $region36: #{tpu_custom_call.1} parent=1 // pred_region
      _
    $region37: #{tpu_custom_call.1} parent=1 // pred_fallthru
      _
    // Predicated region
    $region38: #{tpu_custom_call.1} parent=1 // pred_check
      _
    $region39: #{tpu_custom_call.1} parent=1 // pred_check_branch
      %103 = sbr.rel (0) target = $region41
    $region40: #{tpu_custom_call.1} parent=1 // pred_region
      _
    $region41: #{tpu_custom_call.1} parent=1 // pred_fallthru
      _
    // Predicated region
    $region42: #{tpu_custom_call.1} parent=1 // pred_check
      _
    $region43: #{tpu_custom_call.1} parent=1 // pred_check_branch
      %105 = sbr.rel (0) target = $region45
    $region44: #{tpu_custom_call.1} parent=1 // pred_region
      _
    $region45: #{tpu_custom_call.1} parent=1 // pred_fallthru
      _
    // Predicated region
    $region46: #{tpu_custom_call.1} parent=1 // pred_check
      _
    $region47: #{tpu_custom_call.1} parent=1 // pred_check_branch
      %107 = sbr.rel (0) target = $region49
    $region48: #{tpu_custom_call.1} parent=1 // pred_region
      %s109 = ssub.s32 2048, 2048
      %110 = vsyncadd [#allocation12], %s109
      %s111 = sshll.u32 [#allocation11], 4
      %s112 = int_to_ptr.vmem [resolvable:$true] %s111
      %117 = dma.hbm_to_vmem [thread:$0]  %s11, 2048, %s112, [#allocation12], 128, 128, 8
    $region49: #{tpu_custom_call.1} parent=1 // pred_fallthru
      _
    // Predicated region
    $region50: #{tpu_custom_call.1} parent=1 // pred_check
      _
    $region51: #{tpu_custom_call.1} parent=1 // pred_check_branch
      %119 = sbr.rel (0) target = $region53
    $region52: #{tpu_custom_call.1} parent=1 // pred_region
      _
    $region53: #{tpu_custom_call.1} parent=1 // pred_fallthru
      _
    // Predicated region
    $region54: #{tpu_custom_call.1} parent=1 // pred_check
      _
    $region55: #{tpu_custom_call.1} parent=1 // pred_check_branch
      %121 = sbr.rel (0) target = $region57
    $region56: #{tpu_custom_call.1} parent=1 // pred_region
      _
    $region57: #{tpu_custom_call.1} parent=1 // pred_fallthru
      _
    // Predicated region
    $region58: #{tpu_custom_call.1} parent=1 // pred_check
      _
    $region59: #{tpu_custom_call.1} parent=1 // pred_check_branch
      %123 = sbr.rel (0) target = $region61
    $region60: #{tpu_custom_call.1} parent=1 // pred_region
      _
    $region61: #{tpu_custom_call.1} parent=1 // pred_fallthru
      _
    // Predicated region
    $region62: #{tpu_custom_call.1} parent=1 // pred_check
      _
    $region63: #{tpu_custom_call.1} parent=1 // pred_check_branch
      %125 = sbr.rel (0) target = $region65
    $region64: #{tpu_custom_call.1} parent=1 // pred_region
      %s127 = ssub.s32 2048, 2048
      %128 = vsyncadd [#allocation12], %s127
      %s129 = sshll.u32 [#allocation13], 4
      %s130 = int_to_ptr.vmem [resolvable:$true] %s129
      %135 = dma.hbm_to_vmem [thread:$0]  %s15, 2048, %s130, [#allocation12], 128, 128, 8
    $region65: #{tpu_custom_call.1} parent=1 // pred_fallthru
      _
    // Predicated region
    $region66: #{tpu_custom_call.1} parent=1 // pred_check
      _
    $region67: #{tpu_custom_call.1} parent=1 // pred_check_branch
      %137 = sbr.rel (0) target = $region69
    $region68: #{tpu_custom_call.1} parent=1 // pred_region
      _
    $region69: #{tpu_custom_call.1} parent=1 // pred_fallthru
      _
    // Predicated region
    $region70: #{tpu_custom_call.1} parent=1 // pred_check
      _
    $region71: #{tpu_custom_call.1} parent=1 // pred_check_branch
      %139 = sbr.rel (0) target = $region73
    $region72: #{tpu_custom_call.1} parent=1 // pred_region
      _
    $region73: #{tpu_custom_call.1} parent=1 // pred_fallthru
      _
    // Predicated region
    $region74: #{tpu_custom_call.1} parent=1 // pred_check
      _
    $region75: #{tpu_custom_call.1} parent=1 // pred_check_branch
      %141 = sbr.rel (0) target = $region77
    $region76: #{tpu_custom_call.1} parent=1 // pred_region
      _
    $region77: #{tpu_custom_call.1} parent=1 // pred_fallthru
      _
    // Predicated region
    $region78: #{tpu_custom_call.1} parent=1 // pred_check
      _
    $region79: #{tpu_custom_call.1} parent=1 // pred_check_branch
      %143 = sbr.rel (0) target = $region81
    $region80: #{tpu_custom_call.1} parent=1 // pred_region
      %s145 = ssub.s32 2048, 2048
      %146 = vsyncadd [#allocation15], %s145
      %s147 = sshll.u32 [#allocation14], 4
      %s148 = int_to_ptr.vmem [resolvable:$true] %s147
      %153 = dma.hbm_to_vmem [thread:$0]  %s19, 2048, %s148, [#allocation15], 128, 128, 8
    $region81: #{tpu_custom_call.1} parent=1 // pred_fallthru
      _
    // Predicated region
    $region82: #{tpu_custom_call.1} parent=1 // pred_check
      _
    $region83: #{tpu_custom_call.1} parent=1 // pred_check_branch
      %155 = sbr.rel (0) target = $region85
    $region84: #{tpu_custom_call.1} parent=1 // pred_region
      _
    $region85: #{tpu_custom_call.1} parent=1 // pred_fallthru
      _
    // Predicated region
    $region86: #{tpu_custom_call.1} parent=1 // pred_check
      _
    $region87: #{tpu_custom_call.1} parent=1 // pred_check_branch
      %157 = sbr.rel (0) target = $region89
    $region88: #{tpu_custom_call.1} parent=1 // pred_region
      _
    $region89: #{tpu_custom_call.1} parent=1 // pred_fallthru
      _
    // Predicated region
    $region90: #{tpu_custom_call.1} parent=1 // pred_check
      _
    $region91: #{tpu_custom_call.1} parent=1 // pred_check_branch
      %159 = sbr.rel (0) target = $region93
    $region92: #{tpu_custom_call.1} parent=1 // pred_region
      _
    $region93: #{tpu_custom_call.1} parent=1 // pred_fallthru
      _
    // Predicated region
    $region94: #{tpu_custom_call.1} parent=1 // pred_check
      _
    $region95: #{tpu_custom_call.1} parent=1 // pred_check_branch
      %161 = sbr.rel (0) target = $region97
    $region96: #{tpu_custom_call.1} parent=1 // pred_region
      %s163 = ssub.s32 16384, 16384
      %164 = vsyncadd [#allocation15], %s163
      %s165 = sshll.u32 [#allocation16], 4
      %s166 = int_to_ptr.vmem [resolvable:$true] %s165
      %171 = dma.hbm_to_vmem [thread:$0]  %s23, 16384, %s166, [#allocation15], 1024, 1024, 64
    $region97: #{tpu_custom_call.1} parent=1 // pred_fallthru
      _
    // Predicated region
    $region98: #{tpu_custom_call.1} parent=1 // pred_check
      _
    $region99: #{tpu_custom_call.1} parent=1 // pred_check_branch
      %173 = sbr.rel (0) target = $region101
    $region100: #{tpu_custom_call.1} parent=1 // pred_region
      _
    $region101: #{tpu_custom_call.1} parent=1 // pred_fallthru
      _
    // Predicated region
    $region102: #{tpu_custom_call.1} parent=1 // pred_check
      _
    $region103: #{tpu_custom_call.1} parent=1 // pred_check_branch
      %175 = sbr.rel (0) target = $region105
    $region104: #{tpu_custom_call.1} parent=1 // pred_region
      %176 = dma.done [#allocation3], 256
    $region105: #{tpu_custom_call.1} parent=1 // pred_fallthru
      _
    // Predicated region
    $region106: #{tpu_custom_call.1} parent=1 // pred_check
      _
    $region107: #{tpu_custom_call.1} parent=1 // pred_check_branch
      %178 = sbr.rel (0) target = $region109
    $region108: #{tpu_custom_call.1} parent=1 // pred_region
      %179 = dma.done [#allocation6], 256
    $region109: #{tpu_custom_call.1} parent=1 // pred_fallthru
      _
    // Predicated region
    $region110: #{tpu_custom_call.1} parent=1 // pred_check
      _
    $region111: #{tpu_custom_call.1} parent=1 // pred_check_branch
      %181 = sbr.rel (0) target = $region113
    $region112: #{tpu_custom_call.1} parent=1 // pred_region
      %182 = dma.done [#allocation6], 128
    $region113: #{tpu_custom_call.1} parent=1 // pred_fallthru
      _
    // Predicated region
    $region114: #{tpu_custom_call.1} parent=1 // pred_check
      _
    $region115: #{tpu_custom_call.1} parent=1 // pred_check_branch
      %184 = sbr.rel (0) target = $region117
    $region116: #{tpu_custom_call.1} parent=1 // pred_region
      %185 = dma.done [#allocation9], 2048
    $region117: #{tpu_custom_call.1} parent=1 // pred_fallthru
      _
    // Predicated region
    $region118: #{tpu_custom_call.1} parent=1 // pred_check
      _
    $region119: #{tpu_custom_call.1} parent=1 // pred_check_branch
      %187 = sbr.rel (0) target = $region121
    $region120: #{tpu_custom_call.1} parent=1 // pred_region
      %188 = dma.done [#allocation9], 2048
    $region121: #{tpu_custom_call.1} parent=1 // pred_fallthru
      _
    // Predicated region
    $region122: #{tpu_custom_call.1} parent=1 // pred_check
      _
    $region123: #{tpu_custom_call.1} parent=1 // pred_check_branch
      %190 = sbr.rel (0) target = $region125
    $region124: #{tpu_custom_call.1} parent=1 // pred_region
      %191 = dma.done [#allocation12], 2048
    $region125: #{tpu_custom_call.1} parent=1 // pred_fallthru
      _
    // Predicated region
    $region126: #{tpu_custom_call.1} parent=1 // pred_check
      _
    $region127: #{tpu_custom_call.1} parent=1 // pred_check_branch
      %193 = sbr.rel (0) target = $region129
    $region128: #{tpu_custom_call.1} parent=1 // pred_region
      %194 = dma.done [#allocation12], 2048
    $region129: #{tpu_custom_call.1} parent=1 // pred_fallthru
      _
    // Predicated region
    $region130: #{tpu_custom_call.1} parent=1 // pred_check
      _
    $region131: #{tpu_custom_call.1} parent=1 // pred_check_branch
      %196 = sbr.rel (0) target = $region133
    $region132: #{tpu_custom_call.1} parent=1 // pred_region
      %197 = dma.done [#allocation15], 2048
    $region133: #{tpu_custom_call.1} parent=1 // pred_fallthru
      _
    // Predicated region
    $region134: #{tpu_custom_call.1} parent=1 // pred_check
      _
    $region135: #{tpu_custom_call.1} parent=1 // pred_check_branch
      %199 = sbr.rel (0) target = $region137
    $region136: #{tpu_custom_call.1} parent=1 // pred_region
      %200 = dma.done [#allocation15], 16384
    $region137: #{tpu_custom_call.1} parent=1 // pred_fallthru
      _
    %v201 = vld [vmem:[#allocation2] sm:$0xff]
    %v202 = vld [vmem:[#allocation2 + $0x8] sm:$0xff]
    %v203 = vld [vmem:[#allocation5] sm:$0xff]
    %v204 = vld [vmem:[#allocation5 + $0x8] sm:$0xff]
    %v205 = vld [vmem:[#allocation8] sm:$0xff]
    %v206 = vld [vmem:[#allocation8 + $0x8] sm:$0xff]
    %v207 = vld [vmem:[#allocation8 + $0x10] sm:$0xff]
    %v208 = vld [vmem:[#allocation8 + $0x18] sm:$0xff]
    %v209 = vld [vmem:[#allocation8 + $0x20] sm:$0xff]
    %v210 = vld [vmem:[#allocation8 + $0x28] sm:$0xff]
    %v211 = vld [vmem:[#allocation8 + $0x30] sm:$0xff]
    %v212 = vld [vmem:[#allocation8 + $0x38] sm:$0xff]
    %v213 = vld [vmem:[#allocation8 + $0x40] sm:$0xff]
    %v214 = vld [vmem:[#allocation8 + $0x48] sm:$0xff]
    %v215 = vld [vmem:[#allocation8 + $0x50] sm:$0xff]
    %v216 = vld [vmem:[#allocation8 + $0x58] sm:$0xff]
    %v217 = vld [vmem:[#allocation8 + $0x60] sm:$0xff]
    %v218 = vld [vmem:[#allocation8 + $0x68] sm:$0xff]
    %v219 = vld [vmem:[#allocation8 + $0x70] sm:$0xff]
    %v220 = vld [vmem:[#allocation8 + $0x78] sm:$0xff]
    %221 = vmatprep.subr.mxu0 0.0
    %222 = vmatpush1.msra.mxu0 %v220
    %223 = vmatprep.subr.mxu0 0.0
    %224 = vmatpush1.msra.mxu0 %v219
    %225 = vmatprep.subr.mxu0 0.0
    %226 = vmatpush1.msra.mxu0 %v218
    %227 = vmatprep.subr.mxu0 0.0
    %228 = vmatpush1.msra.mxu0 %v217
    %229 = vmatprep.subr.mxu0 0.0
    %230 = vmatpush1.msra.mxu0 %v216
    %231 = vmatprep.subr.mxu0 0.0
    %232 = vmatpush1.msra.mxu0 %v215
    %233 = vmatprep.subr.mxu0 0.0
    %234 = vmatpush1.msra.mxu0 %v214
    %235 = vmatprep.subr.mxu0 0.0
    %236 = vmatpush1.msra.mxu0 %v213
    %237 = vmatprep.subr.mxu0 0.0
    %238 = vmatpush1.msra.mxu0 %v212
    %239 = vmatprep.subr.mxu0 0.0
    %240 = vmatpush1.msra.mxu0 %v211
    %241 = vmatprep.subr.mxu0 0.0
    %242 = vmatpush1.msra.mxu0 %v210
    %243 = vmatprep.subr.mxu0 0.0
    %244 = vmatpush1.msra.mxu0 %v209
    %245 = vmatprep.subr.mxu0 0.0
    %246 = vmatpush1.msra.mxu0 %v208
    %247 = vmatprep.subr.mxu0 0.0
    %248 = vmatpush1.msra.mxu0 %v207
    %249 = vmatprep.subr.mxu0 0.0
    %250 = vmatpush1.msra.mxu0 %v206
    %251 = vmatprep.subr.mxu0 0.0
    %252 = vmatpush1.msra.mxu0 %v205
    %253 = vmatprep.subr.mxu0 0.0
    %254 = vmatpush2.msra.mxu0 0.0
    %255 = vmatprep.subr.mxu0 0.0
    %256 = vmatpush2.msra.mxu0 0.0
    %257 = vmatprep.subr.mxu0 0.0
    %258 = vmatpush2.msra.mxu0 0.0
    %259 = vmatprep.subr.mxu0 0.0
    %260 = vmatpush2.msra.mxu0 0.0
    %261 = vmatprep.subr.mxu0 0.0
    %262 = vmatpush2.msra.mxu0 0.0
    %263 = vmatprep.subr.mxu0 0.0
    %264 = vmatpush2.msra.mxu0 0.0
    %265 = vmatprep.subr.mxu0 0.0
    %266 = vmatpush2.msra.mxu0 0.0
    %267 = vmatprep.subr.mxu0 0.0
    %268 = vmatpush2.msra.mxu0 0.0
    %269 = vmatprep.subr.mxu0 0.0
    %270 = vmatpush2.msra.mxu0 0.0
    %271 = vmatprep.subr.mxu0 0.0
    %272 = vmatpush2.msra.mxu0 0.0
    %273 = vmatprep.subr.mxu0 0.0
    %274 = vmatpush2.msra.mxu0 0.0
    %275 = vmatprep.subr.mxu0 0.0
    %276 = vmatpush2.msra.mxu0 0.0
    %277 = vmatprep.subr.mxu0 0.0
    %278 = vmatpush2.msra.mxu0 0.0
    %279 = vmatprep.subr.mxu0 0.0
    %280 = vmatpush2.msra.mxu0 0.0
    %281 = vmatprep.subr.mxu0 0.0
    %282 = vmatpush2.msra.mxu0 0.0
    %283 = vmatprep.subr.mxu0 0.0
    %284 = vmatpush2.msra.mxu0 0.0
    %285 = vmatprep.mubr.f32.mxu0 0.0
    %286 = vmatmul.mubr.f32.gmra.mxu0 %v203
    %v287 = vpop.f32.mrf.mxu0
    %v288 = vadd.f32 0.0, %v287
    %v289 = vpop.f32.mrf.mxu0
    %290 = vmatprep.mubr.f32.mxu0 0.0
    %291 = vmatmul.mubr.f32.gmra.mxu0 %v204
    %v292 = vpop.f32.mrf.mxu0
    %v293 = vadd.f32 0.0, %v292
    %v294 = vpop.f32.mrf.mxu0
    %295 = vdwg.mxu0
    %v296 = vld [vmem:[%s4] sm:$0x1]
    %v298 = vlaneseq
    %v299 = vshrl.u32 %v298, 7
    %v300 = vsub.s32 0, %v299
    %v301 = vrot.slane %v296, %v300
    %vm303 = vcmask 130048
    %v305 = vsel %vm303, %v201, 0
    %v308 = vsel %vm303, %v202, 0
    %310 = vmatprep.subr.mxu0 0.0
    %311 = vmatpush1.msra.mxu0 0.0
    %312 = vmatprep.subr.mxu0 0.0
    %313 = vmatpush1.msra.mxu0 0.0
    %314 = vmatprep.subr.mxu0 0.0
    %315 = vmatpush1.msra.mxu0 0.0
    %316 = vmatprep.subr.mxu0 0.0
    %317 = vmatpush1.msra.mxu0 0.0
    %318 = vmatprep.subr.mxu0 0.0
    %319 = vmatpush1.msra.mxu0 0.0
    %320 = vmatprep.subr.mxu0 0.0
    %321 = vmatpush1.msra.mxu0 0.0
    %322 = vmatprep.subr.mxu0 0.0
    %323 = vmatpush1.msra.mxu0 0.0
    %324 = vmatprep.subr.mxu0 0.0
    %325 = vmatpush1.msra.mxu0 0.0
    %326 = vmatprep.subr.mxu0 0.0
    %327 = vmatpush1.msra.mxu0 0.0
    %328 = vmatprep.subr.mxu0 0.0
    %329 = vmatpush1.msra.mxu0 0.0
    %330 = vmatprep.subr.mxu0 0.0
    %331 = vmatpush1.msra.mxu0 0.0
    %332 = vmatprep.subr.mxu0 0.0
    %333 = vmatpush1.msra.mxu0 0.0
    %334 = vmatprep.subr.mxu0 0.0
    %335 = vmatpush1.msra.mxu0 0.0
    %336 = vmatprep.subr.mxu0 0.0
    %337 = vmatpush1.msra.mxu0 0.0
    %338 = vmatprep.subr.mxu0 0.0
    %339 = vmatpush1.msra.mxu0 %v293
    %340 = vmatprep.subr.mxu0 0.0
    %341 = vmatpush1.msra.mxu0 %v288
    %342 = vmatprep.subr.mxu0 0.0
    %343 = vmatpush2.msra.mxu0 0.0
    %344 = vmatprep.subr.mxu0 0.0
    %345 = vmatpush2.msra.mxu0 0.0
    %346 = vmatprep.subr.mxu0 0.0
    %347 = vmatpush2.msra.mxu0 0.0
    %348 = vmatprep.subr.mxu0 0.0
    %349 = vmatpush2.msra.mxu0 0.0
    %350 = vmatprep.subr.mxu0 0.0
    %351 = vmatpush2.msra.mxu0 0.0
    %352 = vmatprep.subr.mxu0 0.0
    %353 = vmatpush2.msra.mxu0 0.0
    %354 = vmatprep.subr.mxu0 0.0
    %355 = vmatpush2.msra.mxu0 0.0
    %356 = vmatprep.subr.mxu0 0.0
    %357 = vmatpush2.msra.mxu0 0.0
    %358 = vmatprep.subr.mxu0 0.0
    %359 = vmatpush2.msra.mxu0 0.0
    %360 = vmatprep.subr.mxu0 0.0
    %361 = vmatpush2.msra.mxu0 0.0
    %362 = vmatprep.subr.mxu0 0.0
    %363 = vmatpush2.msra.mxu0 0.0
    %364 = vmatprep.subr.mxu0 0.0
    %365 = vmatpush2.msra.mxu0 0.0
    %366 = vmatprep.subr.mxu0 0.0
    %367 = vmatpush2.msra.mxu0 0.0
    %368 = vmatprep.subr.mxu0 0.0
    %369 = vmatpush2.msra.mxu0 0.0
    %370 = vmatprep.subr.mxu0 0.0
    %371 = vmatpush2.msra.mxu0 0.0
    %372 = vmatprep.subr.mxu0 0.0
    %373 = vmatpush2.msra.mxu0 0.0
    %374 = vmatprep.mubr.f32.mxu0 0.0
    %375 = vmatmul.mubr.f32.gmra.mxu0 %v305
    %v376 = vpop.f32.mrf.mxu0
    %v377 = vadd.f32 %v301, %v376
    %v378 = vpop.f32.mrf.mxu0
    %379 = vmatprep.mubr.f32.mxu0 0.0
    %380 = vmatmul.mubr.f32.gmra.mxu0 %v308
    %v381 = vpop.f32.mrf.mxu0
    %v382 = vadd.f32 %v301, %v381
    %v383 = vpop.f32.mrf.mxu0
    %384 = vdwg.mxu0
    %v385 = vmax.f32 %v377, 0.0
    %v386 = vmax.f32 %v382, 0.0
    %v387 = vld [vmem:[%s5] sm:$0x1]
    %v389 = vlaneseq
    %v390 = vshrl.u32 %v389, 7
    %v391 = vsub.s32 0, %v390
    %v392 = vrot.slane %v387, %v391
    %v394 = vmul.f32 %v385, %v392
    %v395 = vmul.f32 %v386, %v392
    %v396 = vld [vmem:[%s6] sm:$0x1]
    %v398 = vlaneseq
    %v399 = vshrl.u32 %v398, 7
    %v400 = vsub.s32 0, %v399
    %v401 = vrot.slane %v396, %v400
    %v403 = vadd.f32 %v394, %v401
    %v404 = vadd.f32 %v395, %v401
    %v405 = vld [vmem:[#allocation10] sm:$0xff]
    %v406 = vld [vmem:[#allocation10 + $0x8] sm:$0xff]
    %v407 = vld [vmem:[#allocation10 + $0x10] sm:$0xff]
    %v408 = vld [vmem:[#allocation10 + $0x18] sm:$0xff]
    %v409 = vld [vmem:[#allocation10 + $0x20] sm:$0xff]
    %v410 = vld [vmem:[#allocation10 + $0x28] sm:$0xff]
    %v411 = vld [vmem:[#allocation10 + $0x30] sm:$0xff]
    %v412 = vld [vmem:[#allocation10 + $0x38] sm:$0xff]
    %v413 = vld [vmem:[#allocation10 + $0x40] sm:$0xff]
    %v414 = vld [vmem:[#allocation10 + $0x48] sm:$0xff]
    %v415 = vld [vmem:[#allocation10 + $0x50] sm:$0xff]
    %v416 = vld [vmem:[#allocation10 + $0x58] sm:$0xff]
    %v417 = vld [vmem:[#allocation10 + $0x60] sm:$0xff]
    %v418 = vld [vmem:[#allocation10 + $0x68] sm:$0xff]
    %v419 = vld [vmem:[#allocation10 + $0x70] sm:$0xff]
    %v420 = vld [vmem:[#allocation10 + $0x78] sm:$0xff]
    %421 = vmatprep.subr.mxu0 0.0
    %422 = vmatpush1.msra.mxu0 %v420
    %423 = vmatprep.subr.mxu0 0.0
    %424 = vmatpush1.msra.mxu0 %v419
    %425 = vmatprep.subr.mxu0 0.0
    %426 = vmatpush1.msra.mxu0 %v418
    %427 = vmatprep.subr.mxu0 0.0
    %428 = vmatpush1.msra.mxu0 %v417
    %429 = vmatprep.subr.mxu0 0.0
    %430 = vmatpush1.msra.mxu0 %v416
    %431 = vmatprep.subr.mxu0 0.0
    %432 = vmatpush1.msra.mxu0 %v415
    %433 = vmatprep.subr.mxu0 0.0
    %434 = vmatpush1.msra.mxu0 %v414
    %435 = vmatprep.subr.mxu0 0.0
    %436 = vmatpush1.msra.mxu0 %v413
    %437 = vmatprep.subr.mxu0 0.0
    %438 = vmatpush1.msra.mxu0 %v412
    %439 = vmatprep.subr.mxu0 0.0
    %440 = vmatpush1.msra.mxu0 %v411
    %441 = vmatprep.subr.mxu0 0.0
    %442 = vmatpush1.msra.mxu0 %v410
    %443 = vmatprep.subr.mxu0 0.0
    %444 = vmatpush1.msra.mxu0 %v409
    %445 = vmatprep.subr.mxu0 0.0
    %446 = vmatpush1.msra.mxu0 %v408
    %447 = vmatprep.subr.mxu0 0.0
    %448 = vmatpush1.msra.mxu0 %v407
    %449 = vmatprep.subr.mxu0 0.0
    %450 = vmatpush1.msra.mxu0 %v406
    %451 = vmatprep.subr.mxu0 0.0
    %452 = vmatpush1.msra.mxu0 %v405
    %453 = vmatprep.subr.mxu0 0.0
    %454 = vmatpush2.msra.mxu0 0.0
    %455 = vmatprep.subr.mxu0 0.0
    %456 = vmatpush2.msra.mxu0 0.0
    %457 = vmatprep.subr.mxu0 0.0
    %458 = vmatpush2.msra.mxu0 0.0
    %459 = vmatprep.subr.mxu0 0.0
    %460 = vmatpush2.msra.mxu0 0.0
    %461 = vmatprep.subr.mxu0 0.0
    %462 = vmatpush2.msra.mxu0 0.0
    %463 = vmatprep.subr.mxu0 0.0
    %464 = vmatpush2.msra.mxu0 0.0
    %465 = vmatprep.subr.mxu0 0.0
    %466 = vmatpush2.msra.mxu0 0.0
    %467 = vmatprep.subr.mxu0 0.0
    %468 = vmatpush2.msra.mxu0 0.0
    %469 = vmatprep.subr.mxu0 0.0
    %470 = vmatpush2.msra.mxu0 0.0
    %471 = vmatprep.subr.mxu0 0.0
    %472 = vmatpush2.msra.mxu0 0.0
    %473 = vmatprep.subr.mxu0 0.0
    %474 = vmatpush2.msra.mxu0 0.0
    %475 = vmatprep.subr.mxu0 0.0
    %476 = vmatpush2.msra.mxu0 0.0
    %477 = vmatprep.subr.mxu0 0.0
    %478 = vmatpush2.msra.mxu0 0.0
    %479 = vmatprep.subr.mxu0 0.0
    %480 = vmatpush2.msra.mxu0 0.0
    %481 = vmatprep.subr.mxu0 0.0
    %482 = vmatpush2.msra.mxu0 0.0
    %483 = vmatprep.subr.mxu0 0.0
    %484 = vmatpush2.msra.mxu0 0.0
    %485 = vmatprep.mubr.f32.mxu0 0.0
    %486 = vmatmul.mubr.f32.gmra.mxu0 %v403
    %v487 = vpop.f32.mrf.mxu0
    %v488 = vadd.f32 0.0, %v487
    %v489 = vpop.f32.mrf.mxu0
    %490 = vmatprep.mubr.f32.mxu0 0.0
    %491 = vmatmul.mubr.f32.gmra.mxu0 %v404
    %v492 = vpop.f32.mrf.mxu0
    %v493 = vadd.f32 0.0, %v492
    %v494 = vpop.f32.mrf.mxu0
    %495 = vdwg.mxu0
    %v496 = vld [vmem:[%s8] sm:$0x1]
    %v498 = vlaneseq
    %v499 = vshrl.u32 %v498, 7
    %v500 = vsub.s32 0, %v499
    %v501 = vrot.slane %v496, %v500
    %503 = vmatprep.subr.mxu0 0.0
    %504 = vmatpush1.msra.mxu0 0.0
    %505 = vmatprep.subr.mxu0 0.0
    %506 = vmatpush1.msra.mxu0 0.0
    %507 = vmatprep.subr.mxu0 0.0
    %508 = vmatpush1.msra.mxu0 0.0
    %509 = vmatprep.subr.mxu0 0.0
    %510 = vmatpush1.msra.mxu0 0.0
    %511 = vmatprep.subr.mxu0 0.0
    %512 = vmatpush1.msra.mxu0 0.0
    %513 = vmatprep.subr.mxu0 0.0
    %514 = vmatpush1.msra.mxu0 0.0
    %515 = vmatprep.subr.mxu0 0.0
    %516 = vmatpush1.msra.mxu0 0.0
    %517 = vmatprep.subr.mxu0 0.0
    %518 = vmatpush1.msra.mxu0 0.0
    %519 = vmatprep.subr.mxu0 0.0
    %520 = vmatpush1.msra.mxu0 0.0
    %521 = vmatprep.subr.mxu0 0.0
    %522 = vmatpush1.msra.mxu0 0.0
    %523 = vmatprep.subr.mxu0 0.0
    %524 = vmatpush1.msra.mxu0 0.0
    %525 = vmatprep.subr.mxu0 0.0
    %526 = vmatpush1.msra.mxu0 0.0
    %527 = vmatprep.subr.mxu0 0.0
    %528 = vmatpush1.msra.mxu0 0.0
    %529 = vmatprep.subr.mxu0 0.0
    %530 = vmatpush1.msra.mxu0 0.0
    %531 = vmatprep.subr.mxu0 0.0
    %532 = vmatpush1.msra.mxu0 %v493
    %533 = vmatprep.subr.mxu0 0.0
    %534 = vmatpush1.msra.mxu0 %v488
    %535 = vmatprep.subr.mxu0 0.0
    %536 = vmatpush2.msra.mxu0 0.0
    %537 = vmatprep.subr.mxu0 0.0
    %538 = vmatpush2.msra.mxu0 0.0
    %539 = vmatprep.subr.mxu0 0.0
    %540 = vmatpush2.msra.mxu0 0.0
    %541 = vmatprep.subr.mxu0 0.0
    %542 = vmatpush2.msra.mxu0 0.0
    %543 = vmatprep.subr.mxu0 0.0
    %544 = vmatpush2.msra.mxu0 0.0
    %545 = vmatprep.subr.mxu0 0.0
    %546 = vmatpush2.msra.mxu0 0.0
    %547 = vmatprep.subr.mxu0 0.0
    %548 = vmatpush2.msra.mxu0 0.0
    %549 = vmatprep.subr.mxu0 0.0
    %550 = vmatpush2.msra.mxu0 0.0
    %551 = vmatprep.subr.mxu0 0.0
    %552 = vmatpush2.msra.mxu0 0.0
    %553 = vmatprep.subr.mxu0 0.0
    %554 = vmatpush2.msra.mxu0 0.0
    %555 = vmatprep.subr.mxu0 0.0
    %556 = vmatpush2.msra.mxu0 0.0
    %557 = vmatprep.subr.mxu0 0.0
    %558 = vmatpush2.msra.mxu0 0.0
    %559 = vmatprep.subr.mxu0 0.0
    %560 = vmatpush2.msra.mxu0 0.0
    %561 = vmatprep.subr.mxu0 0.0
    %562 = vmatpush2.msra.mxu0 0.0
    %563 = vmatprep.subr.mxu0 0.0
    %564 = vmatpush2.msra.mxu0 0.0
    %565 = vmatprep.subr.mxu0 0.0
    %566 = vmatpush2.msra.mxu0 0.0
    %567 = vmatprep.mubr.f32.mxu0 0.0
    %568 = vmatmul.mubr.f32.gmra.mxu0 %v305
    %v569 = vpop.f32.mrf.mxu0
    %v570 = vadd.f32 %v501, %v569
    %v571 = vpop.f32.mrf.mxu0
    %572 = vmatprep.mubr.f32.mxu0 0.0
    %573 = vmatmul.mubr.f32.gmra.mxu0 %v308
    %v574 = vpop.f32.mrf.mxu0
    %v575 = vadd.f32 %v501, %v574
    %v576 = vpop.f32.mrf.mxu0
    %577 = vdwg.mxu0
    %v578 = vld [vmem:[%s9] sm:$0x1]
    %v580 = vlaneseq
    %v581 = vshrl.u32 %v580, 7
    %v582 = vsub.s32 0, %v581
    %v583 = vrot.slane %v578, %v582
    %v585 = vmul.f32 %v570, %v583
    %v586 = vmul.f32 %v575, %v583
    %v587 = vld [vmem:[%s10] sm:$0x1]
    %v589 = vlaneseq
    %v590 = vshrl.u32 %v589, 7
    %v591 = vsub.s32 0, %v590
    %v592 = vrot.slane %v587, %v591
    %v594 = vadd.f32 %v585, %v592
    %v595 = vadd.f32 %v586, %v592
    %v596 = vld [vmem:[#allocation11] sm:$0xff]
    %v597 = vld [vmem:[#allocation11 + $0x8] sm:$0xff]
    %v598 = vld [vmem:[#allocation11 + $0x10] sm:$0xff]
    %v599 = vld [vmem:[#allocation11 + $0x18] sm:$0xff]
    %v600 = vld [vmem:[#allocation11 + $0x20] sm:$0xff]
    %v601 = vld [vmem:[#allocation11 + $0x28] sm:$0xff]
    %v602 = vld [vmem:[#allocation11 + $0x30] sm:$0xff]
    %v603 = vld [vmem:[#allocation11 + $0x38] sm:$0xff]
    %v604 = vld [vmem:[#allocation11 + $0x40] sm:$0xff]
    %v605 = vld [vmem:[#allocation11 + $0x48] sm:$0xff]
    %v606 = vld [vmem:[#allocation11 + $0x50] sm:$0xff]
    %v607 = vld [vmem:[#allocation11 + $0x58] sm:$0xff]
    %v608 = vld [vmem:[#allocation11 + $0x60] sm:$0xff]
    %v609 = vld [vmem:[#allocation11 + $0x68] sm:$0xff]
    %v610 = vld [vmem:[#allocation11 + $0x70] sm:$0xff]
    %v611 = vld [vmem:[#allocation11 + $0x78] sm:$0xff]
    %612 = vmatprep.subr.mxu0 0.0
    %613 = vmatpush1.msra.mxu0 %v611
    %614 = vmatprep.subr.mxu0 0.0
    %615 = vmatpush1.msra.mxu0 %v610
    %616 = vmatprep.subr.mxu0 0.0
    %617 = vmatpush1.msra.mxu0 %v609
    %618 = vmatprep.subr.mxu0 0.0
    %619 = vmatpush1.msra.mxu0 %v608
    %620 = vmatprep.subr.mxu0 0.0
    %621 = vmatpush1.msra.mxu0 %v607
    %622 = vmatprep.subr.mxu0 0.0
    %623 = vmatpush1.msra.mxu0 %v606
    %624 = vmatprep.subr.mxu0 0.0
    %625 = vmatpush1.msra.mxu0 %v605
    %626 = vmatprep.subr.mxu0 0.0
    %627 = vmatpush1.msra.mxu0 %v604
    %628 = vmatprep.subr.mxu0 0.0
    %629 = vmatpush1.msra.mxu0 %v603
    %630 = vmatprep.subr.mxu0 0.0
    %631 = vmatpush1.msra.mxu0 %v602
    %632 = vmatprep.subr.mxu0 0.0
    %633 = vmatpush1.msra.mxu0 %v601
    %634 = vmatprep.subr.mxu0 0.0
    %635 = vmatpush1.msra.mxu0 %v600
    %636 = vmatprep.subr.mxu0 0.0
    %637 = vmatpush1.msra.mxu0 %v599
    %638 = vmatprep.subr.mxu0 0.0
    %639 = vmatpush1.msra.mxu0 %v598
    %640 = vmatprep.subr.mxu0 0.0
    %641 = vmatpush1.msra.mxu0 %v597
    %642 = vmatprep.subr.mxu0 0.0
    %643 = vmatpush1.msra.mxu0 %v596
    %644 = vmatprep.subr.mxu0 0.0
    %645 = vmatpush2.msra.mxu0 0.0
    %646 = vmatprep.subr.mxu0 0.0
    %647 = vmatpush2.msra.mxu0 0.0
    %648 = vmatprep.subr.mxu0 0.0
    %649 = vmatpush2.msra.mxu0 0.0
    %650 = vmatprep.subr.mxu0 0.0
    %651 = vmatpush2.msra.mxu0 0.0
    %652 = vmatprep.subr.mxu0 0.0
    %653 = vmatpush2.msra.mxu0 0.0
    %654 = vmatprep.subr.mxu0 0.0
    %655 = vmatpush2.msra.mxu0 0.0
    %656 = vmatprep.subr.mxu0 0.0
    %657 = vmatpush2.msra.mxu0 0.0
    %658 = vmatprep.subr.mxu0 0.0
    %659 = vmatpush2.msra.mxu0 0.0
    %660 = vmatprep.subr.mxu0 0.0
    %661 = vmatpush2.msra.mxu0 0.0
    %662 = vmatprep.subr.mxu0 0.0
    %663 = vmatpush2.msra.mxu0 0.0
    %664 = vmatprep.subr.mxu0 0.0
    %665 = vmatpush2.msra.mxu0 0.0
    %666 = vmatprep.subr.mxu0 0.0
    %667 = vmatpush2.msra.mxu0 0.0
    %668 = vmatprep.subr.mxu0 0.0
    %669 = vmatpush2.msra.mxu0 0.0
    %670 = vmatprep.subr.mxu0 0.0
    %671 = vmatpush2.msra.mxu0 0.0
    %672 = vmatprep.subr.mxu0 0.0
    %673 = vmatpush2.msra.mxu0 0.0
    %674 = vmatprep.subr.mxu0 0.0
    %675 = vmatpush2.msra.mxu0 0.0
    %676 = vmatprep.mubr.f32.mxu0 0.0
    %677 = vmatmul.mubr.f32.gmra.mxu0 %v594
    %v678 = vpop.f32.mrf.mxu0
    %v679 = vadd.f32 0.0, %v678
    %v680 = vpop.f32.mrf.mxu0
    %681 = vmatprep.mubr.f32.mxu0 0.0
    %682 = vmatmul.mubr.f32.gmra.mxu0 %v595
    %v683 = vpop.f32.mrf.mxu0
    %v684 = vadd.f32 0.0, %v683
    %v685 = vpop.f32.mrf.mxu0
    %686 = vdwg.mxu0
    %v687 = vld [vmem:[%s12] sm:$0x1]
    %v689 = vlaneseq
    %v690 = vshrl.u32 %v689, 7
    %v691 = vsub.s32 0, %v690
    %v692 = vrot.slane %v687, %v691
    %694 = vmatprep.subr.mxu0 0.0
    %695 = vmatpush1.msra.mxu0 0.0
    %696 = vmatprep.subr.mxu0 0.0
    %697 = vmatpush1.msra.mxu0 0.0
    %698 = vmatprep.subr.mxu0 0.0
    %699 = vmatpush1.msra.mxu0 0.0
    %700 = vmatprep.subr.mxu0 0.0
    %701 = vmatpush1.msra.mxu0 0.0
    %702 = vmatprep.subr.mxu0 0.0
    %703 = vmatpush1.msra.mxu0 0.0
    %704 = vmatprep.subr.mxu0 0.0
    %705 = vmatpush1.msra.mxu0 0.0
    %706 = vmatprep.subr.mxu0 0.0
    %707 = vmatpush1.msra.mxu0 0.0
    %708 = vmatprep.subr.mxu0 0.0
    %709 = vmatpush1.msra.mxu0 0.0
    %710 = vmatprep.subr.mxu0 0.0
    %711 = vmatpush1.msra.mxu0 0.0
    %712 = vmatprep.subr.mxu0 0.0
    %713 = vmatpush1.msra.mxu0 0.0
    %714 = vmatprep.subr.mxu0 0.0
    %715 = vmatpush1.msra.mxu0 0.0
    %716 = vmatprep.subr.mxu0 0.0
    %717 = vmatpush1.msra.mxu0 0.0
    %718 = vmatprep.subr.mxu0 0.0
    %719 = vmatpush1.msra.mxu0 0.0
    %720 = vmatprep.subr.mxu0 0.0
    %721 = vmatpush1.msra.mxu0 0.0
    %722 = vmatprep.subr.mxu0 0.0
    %723 = vmatpush1.msra.mxu0 %v684
    %724 = vmatprep.subr.mxu0 0.0
    %725 = vmatpush1.msra.mxu0 %v679
    %726 = vmatprep.subr.mxu0 0.0
    %727 = vmatpush2.msra.mxu0 0.0
    %728 = vmatprep.subr.mxu0 0.0
    %729 = vmatpush2.msra.mxu0 0.0
    %730 = vmatprep.subr.mxu0 0.0
    %731 = vmatpush2.msra.mxu0 0.0
    %732 = vmatprep.subr.mxu0 0.0
    %733 = vmatpush2.msra.mxu0 0.0
    %734 = vmatprep.subr.mxu0 0.0
    %735 = vmatpush2.msra.mxu0 0.0
    %736 = vmatprep.subr.mxu0 0.0
    %737 = vmatpush2.msra.mxu0 0.0
    %738 = vmatprep.subr.mxu0 0.0
    %739 = vmatpush2.msra.mxu0 0.0
    %740 = vmatprep.subr.mxu0 0.0
    %741 = vmatpush2.msra.mxu0 0.0
    %742 = vmatprep.subr.mxu0 0.0
    %743 = vmatpush2.msra.mxu0 0.0
    %744 = vmatprep.subr.mxu0 0.0
    %745 = vmatpush2.msra.mxu0 0.0
    %746 = vmatprep.subr.mxu0 0.0
    %747 = vmatpush2.msra.mxu0 0.0
    %748 = vmatprep.subr.mxu0 0.0
    %749 = vmatpush2.msra.mxu0 0.0
    %750 = vmatprep.subr.mxu0 0.0
    %751 = vmatpush2.msra.mxu0 0.0
    %752 = vmatprep.subr.mxu0 0.0
    %753 = vmatpush2.msra.mxu0 0.0
    %754 = vmatprep.subr.mxu0 0.0
    %755 = vmatpush2.msra.mxu0 0.0
    %756 = vmatprep.subr.mxu0 0.0
    %757 = vmatpush2.msra.mxu0 0.0
    %758 = vmatprep.mubr.f32.mxu0 0.0
    %759 = vmatmul.mubr.f32.gmra.mxu0 %v305
    %v760 = vpop.f32.mrf.mxu0
    %v761 = vadd.f32 %v692, %v760
    %v762 = vpop.f32.mrf.mxu0
    %763 = vmatprep.mubr.f32.mxu0 0.0
    %764 = vmatmul.mubr.f32.gmra.mxu0 %v308
    %v765 = vpop.f32.mrf.mxu0
    %v766 = vadd.f32 %v692, %v765
    %v767 = vpop.f32.mrf.mxu0
    %768 = vdwg.mxu0
    %v769 = vld [vmem:[%s13] sm:$0x1]
    %v771 = vlaneseq
    %v772 = vshrl.u32 %v771, 7
    %v773 = vsub.s32 0, %v772
    %v774 = vrot.slane %v769, %v773
    %v776 = vmul.f32 %v761, %v774
    %v777 = vmul.f32 %v766, %v774
    %v778 = vld [vmem:[%s14] sm:$0x1]
    %v780 = vlaneseq
    %v781 = vshrl.u32 %v780, 7
    %v782 = vsub.s32 0, %v781
    %v783 = vrot.slane %v778, %v782
    %v785 = vadd.f32 %v776, %v783
    %v786 = vadd.f32 %v777, %v783
    %v787 = vld [vmem:[#allocation7] sm:$0xff]
    %v789 = vsel %vm303, %v787, 0
    %791 = vmatprep.subr.mxu0 0.0
    %792 = vmatpush1.msra.mxu0 0.0
    %793 = vmatprep.subr.mxu0 0.0
    %794 = vmatpush1.msra.mxu0 0.0
    %795 = vmatprep.subr.mxu0 0.0
    %796 = vmatpush1.msra.mxu0 0.0
    %797 = vmatprep.subr.mxu0 0.0
    %798 = vmatpush1.msra.mxu0 0.0
    %799 = vmatprep.subr.mxu0 0.0
    %800 = vmatpush1.msra.mxu0 0.0
    %801 = vmatprep.subr.mxu0 0.0
    %802 = vmatpush1.msra.mxu0 0.0
    %803 = vmatprep.subr.mxu0 0.0
    %804 = vmatpush1.msra.mxu0 0.0
    %805 = vmatprep.subr.mxu0 0.0
    %806 = vmatpush1.msra.mxu0 0.0
    %807 = vmatprep.subr.mxu0 0.0
    %808 = vmatpush1.msra.mxu0 0.0
    %809 = vmatprep.subr.mxu0 0.0
    %810 = vmatpush1.msra.mxu0 0.0
    %811 = vmatprep.subr.mxu0 0.0
    %812 = vmatpush1.msra.mxu0 0.0
    %813 = vmatprep.subr.mxu0 0.0
    %814 = vmatpush1.msra.mxu0 0.0
    %815 = vmatprep.subr.mxu0 0.0
    %816 = vmatpush1.msra.mxu0 0.0
    %817 = vmatprep.subr.mxu0 0.0
    %818 = vmatpush1.msra.mxu0 0.0
    %819 = vmatprep.subr.mxu0 0.0
    %820 = vmatpush1.msra.mxu0 %v786
    %821 = vmatprep.subr.mxu0 0.0
    %822 = vmatpush1.msra.mxu0 %v785
    %823 = vmatprep.subr.mxu0 0.0
    %824 = vmatpush2.msra.mxu0 0.0
    %825 = vmatprep.subr.mxu0 0.0
    %826 = vmatpush2.msra.mxu0 0.0
    %827 = vmatprep.subr.mxu0 0.0
    %828 = vmatpush2.msra.mxu0 0.0
    %829 = vmatprep.subr.mxu0 0.0
    %830 = vmatpush2.msra.mxu0 0.0
    %831 = vmatprep.subr.mxu0 0.0
    %832 = vmatpush2.msra.mxu0 0.0
    %833 = vmatprep.subr.mxu0 0.0
    %834 = vmatpush2.msra.mxu0 0.0
    %835 = vmatprep.subr.mxu0 0.0
    %836 = vmatpush2.msra.mxu0 0.0
    %837 = vmatprep.subr.mxu0 0.0
    %838 = vmatpush2.msra.mxu0 0.0
    %839 = vmatprep.subr.mxu0 0.0
    %840 = vmatpush2.msra.mxu0 0.0
    %841 = vmatprep.subr.mxu0 0.0
    %842 = vmatpush2.msra.mxu0 0.0
    %843 = vmatprep.subr.mxu0 0.0
    %844 = vmatpush2.msra.mxu0 0.0
    %845 = vmatprep.subr.mxu0 0.0
    %846 = vmatpush2.msra.mxu0 0.0
    %847 = vmatprep.subr.mxu0 0.0
    %848 = vmatpush2.msra.mxu0 0.0
    %849 = vmatprep.subr.mxu0 0.0
    %850 = vmatpush2.msra.mxu0 0.0
    %851 = vmatprep.subr.mxu0 0.0
    %852 = vmatpush2.msra.mxu0 0.0
    %853 = vmatprep.subr.mxu0 0.0
    %854 = vmatpush2.msra.mxu0 0.0
    %855 = vmatprep.mubr.f32.mxu0 0.0
    %856 = vmatmul.mubr.f32.gmra.mxu0 %v789
    %v857 = vpop.f32.mrf.mxu0
    %v858 = vadd.f32 0.0, %v857
    %v859 = vpop.f32.mrf.mxu0
    %860 = vdwg.mxu0
    %v861 = vld [vmem:[#allocation13] sm:$0xff]
    %v862 = vld [vmem:[#allocation13 + $0x8] sm:$0xff]
    %v863 = vld [vmem:[#allocation13 + $0x10] sm:$0xff]
    %v864 = vld [vmem:[#allocation13 + $0x18] sm:$0xff]
    %v865 = vld [vmem:[#allocation13 + $0x20] sm:$0xff]
    %v866 = vld [vmem:[#allocation13 + $0x28] sm:$0xff]
    %v867 = vld [vmem:[#allocation13 + $0x30] sm:$0xff]
    %v868 = vld [vmem:[#allocation13 + $0x38] sm:$0xff]
    %v869 = vld [vmem:[#allocation13 + $0x40] sm:$0xff]
    %v870 = vld [vmem:[#allocation13 + $0x48] sm:$0xff]
    %v871 = vld [vmem:[#allocation13 + $0x50] sm:$0xff]
    %v872 = vld [vmem:[#allocation13 + $0x58] sm:$0xff]
    %v873 = vld [vmem:[#allocation13 + $0x60] sm:$0xff]
    %v874 = vld [vmem:[#allocation13 + $0x68] sm:$0xff]
    %v875 = vld [vmem:[#allocation13 + $0x70] sm:$0xff]
    %v876 = vld [vmem:[#allocation13 + $0x78] sm:$0xff]
    %v877 = vld [vmem:[%s16] sm:$0x1]
    %v879 = vlaneseq
    %v880 = vshrl.u32 %v879, 7
    %v881 = vsub.s32 0, %v880
    %v882 = vrot.slane %v877, %v881
    %884 = vmatprep.subr.mxu0 0.0
    %885 = vmatpush1.msra.mxu0 %v876
    %886 = vmatprep.subr.mxu0 0.0
    %887 = vmatpush1.msra.mxu0 %v875
    %888 = vmatprep.subr.mxu0 0.0
    %889 = vmatpush1.msra.mxu0 %v874
    %890 = vmatprep.subr.mxu0 0.0
    %891 = vmatpush1.msra.mxu0 %v873
    %892 = vmatprep.subr.mxu0 0.0
    %893 = vmatpush1.msra.mxu0 %v872
    %894 = vmatprep.subr.mxu0 0.0
    %895 = vmatpush1.msra.mxu0 %v871
    %896 = vmatprep.subr.mxu0 0.0
    %897 = vmatpush1.msra.mxu0 %v870
    %898 = vmatprep.subr.mxu0 0.0
    %899 = vmatpush1.msra.mxu0 %v869
    %900 = vmatprep.subr.mxu0 0.0
    %901 = vmatpush1.msra.mxu0 %v868
    %902 = vmatprep.subr.mxu0 0.0
    %903 = vmatpush1.msra.mxu0 %v867
    %904 = vmatprep.subr.mxu0 0.0
    %905 = vmatpush1.msra.mxu0 %v866
    %906 = vmatprep.subr.mxu0 0.0
    %907 = vmatpush1.msra.mxu0 %v865
    %908 = vmatprep.subr.mxu0 0.0
    %909 = vmatpush1.msra.mxu0 %v864
    %910 = vmatprep.subr.mxu0 0.0
    %911 = vmatpush1.msra.mxu0 %v863
    %912 = vmatprep.subr.mxu0 0.0
    %913 = vmatpush1.msra.mxu0 %v862
    %914 = vmatprep.subr.mxu0 0.0
    %915 = vmatpush1.msra.mxu0 %v861
    %916 = vmatprep.subr.mxu0 0.0
    %917 = vmatpush2.msra.mxu0 0.0
    %918 = vmatprep.subr.mxu0 0.0
    %919 = vmatpush2.msra.mxu0 0.0
    %920 = vmatprep.subr.mxu0 0.0
    %921 = vmatpush2.msra.mxu0 0.0
    %922 = vmatprep.subr.mxu0 0.0
    %923 = vmatpush2.msra.mxu0 0.0
    %924 = vmatprep.subr.mxu0 0.0
    %925 = vmatpush2.msra.mxu0 0.0
    %926 = vmatprep.subr.mxu0 0.0
    %927 = vmatpush2.msra.mxu0 0.0
    %928 = vmatprep.subr.mxu0 0.0
    %929 = vmatpush2.msra.mxu0 0.0
    %930 = vmatprep.subr.mxu0 0.0
    %931 = vmatpush2.msra.mxu0 0.0
    %932 = vmatprep.subr.mxu0 0.0
    %933 = vmatpush2.msra.mxu0 0.0
    %934 = vmatprep.subr.mxu0 0.0
    %935 = vmatpush2.msra.mxu0 0.0
    %936 = vmatprep.subr.mxu0 0.0
    %937 = vmatpush2.msra.mxu0 0.0
    %938 = vmatprep.subr.mxu0 0.0
    %939 = vmatpush2.msra.mxu0 0.0
    %940 = vmatprep.subr.mxu0 0.0
    %941 = vmatpush2.msra.mxu0 0.0
    %942 = vmatprep.subr.mxu0 0.0
    %943 = vmatpush2.msra.mxu0 0.0
    %944 = vmatprep.subr.mxu0 0.0
    %945 = vmatpush2.msra.mxu0 0.0
    %946 = vmatprep.subr.mxu0 0.0
    %947 = vmatpush2.msra.mxu0 0.0
    %948 = vmatprep.mubr.f32.mxu0 0.0
    %949 = vmatmul.mubr.f32.gmra.mxu0 %v858
    %v950 = vpop.f32.mrf.mxu0
    %v951 = vadd.f32 %v882, %v950
    %v952 = vpop.f32.mrf.mxu0
    %953 = vdwg.mxu0
    %v954 = vmax.f32 %v951, 0.0
    %v955 = vld [vmem:[%s17] sm:$0x1]
    %v957 = vlaneseq
    %v958 = vshrl.u32 %v957, 7
    %v959 = vsub.s32 0, %v958
    %v960 = vrot.slane %v955, %v959
    %v962 = vmul.f32 %v954, %v960
    %v963 = vld [vmem:[%s18] sm:$0x1]
    %v965 = vlaneseq
    %v966 = vshrl.u32 %v965, 7
    %v967 = vsub.s32 0, %v966
    %v968 = vrot.slane %v963, %v967
    %v970 = vadd.f32 %v962, %v968
    %v971 = vld [vmem:[#allocation14] sm:$0xff]
    %v972 = vld [vmem:[#allocation14 + $0x8] sm:$0xff]
    %v973 = vld [vmem:[#allocation14 + $0x10] sm:$0xff]
    %v974 = vld [vmem:[#allocation14 + $0x18] sm:$0xff]
    %v975 = vld [vmem:[#allocation14 + $0x20] sm:$0xff]
    %v976 = vld [vmem:[#allocation14 + $0x28] sm:$0xff]
    %v977 = vld [vmem:[#allocation14 + $0x30] sm:$0xff]
    %v978 = vld [vmem:[#allocation14 + $0x38] sm:$0xff]
    %v979 = vld [vmem:[#allocation14 + $0x40] sm:$0xff]
    %v980 = vld [vmem:[#allocation14 + $0x48] sm:$0xff]
    %v981 = vld [vmem:[#allocation14 + $0x50] sm:$0xff]
    %v982 = vld [vmem:[#allocation14 + $0x58] sm:$0xff]
    %v983 = vld [vmem:[#allocation14 + $0x60] sm:$0xff]
    %v984 = vld [vmem:[#allocation14 + $0x68] sm:$0xff]
    %v985 = vld [vmem:[#allocation14 + $0x70] sm:$0xff]
    %v986 = vld [vmem:[#allocation14 + $0x78] sm:$0xff]
    %v987 = vld [vmem:[%s20] sm:$0x1]
    %v989 = vlaneseq
    %v990 = vshrl.u32 %v989, 7
    %v991 = vsub.s32 0, %v990
    %v992 = vrot.slane %v987, %v991
    %994 = vmatprep.subr.mxu0 0.0
    %995 = vmatpush1.msra.mxu0 %v986
    %996 = vmatprep.subr.mxu0 0.0
    %997 = vmatpush1.msra.mxu0 %v985
    %998 = vmatprep.subr.mxu0 0.0
    %999 = vmatpush1.msra.mxu0 %v984
    %1000 = vmatprep.subr.mxu0 0.0
    %1001 = vmatpush1.msra.mxu0 %v983
    %1002 = vmatprep.subr.mxu0 0.0
    %1003 = vmatpush1.msra.mxu0 %v982
    %1004 = vmatprep.subr.mxu0 0.0
    %1005 = vmatpush1.msra.mxu0 %v981
    %1006 = vmatprep.subr.mxu0 0.0
    %1007 = vmatpush1.msra.mxu0 %v980
    %1008 = vmatprep.subr.mxu0 0.0
    %1009 = vmatpush1.msra.mxu0 %v979
    %1010 = vmatprep.subr.mxu0 0.0
    %1011 = vmatpush1.msra.mxu0 %v978
    %1012 = vmatprep.subr.mxu0 0.0
    %1013 = vmatpush1.msra.mxu0 %v977
    %1014 = vmatprep.subr.mxu0 0.0
    %1015 = vmatpush1.msra.mxu0 %v976
    %1016 = vmatprep.subr.mxu0 0.0
    %1017 = vmatpush1.msra.mxu0 %v975
    %1018 = vmatprep.subr.mxu0 0.0
    %1019 = vmatpush1.msra.mxu0 %v974
    %1020 = vmatprep.subr.mxu0 0.0
    %1021 = vmatpush1.msra.mxu0 %v973
    %1022 = vmatprep.subr.mxu0 0.0
    %1023 = vmatpush1.msra.mxu0 %v972
    %1024 = vmatprep.subr.mxu0 0.0
    %1025 = vmatpush1.msra.mxu0 %v971
    %1026 = vmatprep.subr.mxu0 0.0
    %1027 = vmatpush2.msra.mxu0 0.0
    %1028 = vmatprep.subr.mxu0 0.0
    %1029 = vmatpush2.msra.mxu0 0.0
    %1030 = vmatprep.subr.mxu0 0.0
    %1031 = vmatpush2.msra.mxu0 0.0
    %1032 = vmatprep.subr.mxu0 0.0
    %1033 = vmatpush2.msra.mxu0 0.0
    %1034 = vmatprep.subr.mxu0 0.0
    %1035 = vmatpush2.msra.mxu0 0.0
    %1036 = vmatprep.subr.mxu0 0.0
    %1037 = vmatpush2.msra.mxu0 0.0
    %1038 = vmatprep.subr.mxu0 0.0
    %1039 = vmatpush2.msra.mxu0 0.0
    %1040 = vmatprep.subr.mxu0 0.0
    %1041 = vmatpush2.msra.mxu0 0.0
    %1042 = vmatprep.subr.mxu0 0.0
    %1043 = vmatpush2.msra.mxu0 0.0
    %1044 = vmatprep.subr.mxu0 0.0
    %1045 = vmatpush2.msra.mxu0 0.0
    %1046 = vmatprep.subr.mxu0 0.0
    %1047 = vmatpush2.msra.mxu0 0.0
    %1048 = vmatprep.subr.mxu0 0.0
    %1049 = vmatpush2.msra.mxu0 0.0
    %1050 = vmatprep.subr.mxu0 0.0
    %1051 = vmatpush2.msra.mxu0 0.0
    %1052 = vmatprep.subr.mxu0 0.0
    %1053 = vmatpush2.msra.mxu0 0.0
    %1054 = vmatprep.subr.mxu0 0.0
    %1055 = vmatpush2.msra.mxu0 0.0
    %1056 = vmatprep.subr.mxu0 0.0
    %1057 = vmatpush2.msra.mxu0 0.0
    %1058 = vmatprep.mubr.f32.mxu0 0.0
    %1059 = vmatmul.mubr.f32.gmra.mxu0 %v970
    %v1060 = vpop.f32.mrf.mxu0
    %v1061 = vadd.f32 %v992, %v1060
    %v1062 = vpop.f32.mrf.mxu0
    %1063 = vdwg.mxu0
    %v1064 = vmax.f32 %v1061, 0.0
    %v1065 = vld [vmem:[%s21] sm:$0x1]
    %v1067 = vlaneseq
    %v1068 = vshrl.u32 %v1067, 7
    %v1069 = vsub.s32 0, %v1068
    %v1070 = vrot.slane %v1065, %v1069
    %v1072 = vmul.f32 %v1064, %v1070
    %v1073 = vld [vmem:[%s22] sm:$0x1]
    %v1075 = vlaneseq
    %v1076 = vshrl.u32 %v1075, 7
    %v1077 = vsub.s32 0, %v1076
    %v1078 = vrot.slane %v1073, %v1077
    %v1080 = vadd.f32 %v1072, %v1078
    %v1081 = vld [vmem:[#allocation16] sm:$0xff]
    %v1082 = vld [vmem:[#allocation16 + $0x8] sm:$0xff]
    %v1083 = vld [vmem:[#allocation16 + $0x10] sm:$0xff]
    %v1084 = vld [vmem:[#allocation16 + $0x18] sm:$0xff]
    %v1085 = vld [vmem:[#allocation16 + $0x20] sm:$0xff]
    %v1086 = vld [vmem:[#allocation16 + $0x28] sm:$0xff]
    %v1087 = vld [vmem:[#allocation16 + $0x30] sm:$0xff]
    %v1088 = vld [vmem:[#allocation16 + $0x38] sm:$0xff]
    %v1089 = vld [vmem:[#allocation16 + $0x40] sm:$0xff]
    %v1090 = vld [vmem:[#allocation16 + $0x48] sm:$0xff]
    %v1091 = vld [vmem:[#allocation16 + $0x50] sm:$0xff]
    %v1092 = vld [vmem:[#allocation16 + $0x58] sm:$0xff]
    %v1093 = vld [vmem:[#allocation16 + $0x60] sm:$0xff]
    %v1094 = vld [vmem:[#allocation16 + $0x68] sm:$0xff]
    %v1095 = vld [vmem:[#allocation16 + $0x70] sm:$0xff]
    %v1096 = vld [vmem:[#allocation16 + $0x78] sm:$0xff]
    %v1097 = vld [vmem:[#allocation16 + $0x80] sm:$0xff]
    %v1098 = vld [vmem:[#allocation16 + $0x88] sm:$0xff]
    %v1099 = vld [vmem:[#allocation16 + $0x90] sm:$0xff]
    %v1100 = vld [vmem:[#allocation16 + $0x98] sm:$0xff]
    %v1101 = vld [vmem:[#allocation16 + $0xa0] sm:$0xff]
    %v1102 = vld [vmem:[#allocation16 + $0xa8] sm:$0xff]
    %v1103 = vld [vmem:[#allocation16 + $0xb0] sm:$0xff]
    %v1104 = vld [vmem:[#allocation16 + $0xb8] sm:$0xff]
    %v1105 = vld [vmem:[#allocation16 + $0xc0] sm:$0xff]
    %v1106 = vld [vmem:[#allocation16 + $0xc8] sm:$0xff]
    %v1107 = vld [vmem:[#allocation16 + $0xd0] sm:$0xff]
    %v1108 = vld [vmem:[#allocation16 + $0xd8] sm:$0xff]
    %v1109 = vld [vmem:[#allocation16 + $0xe0] sm:$0xff]
    %v1110 = vld [vmem:[#allocation16 + $0xe8] sm:$0xff]
    %v1111 = vld [vmem:[#allocation16 + $0xf0] sm:$0xff]
    %v1112 = vld [vmem:[#allocation16 + $0xf8] sm:$0xff]
    %v1113 = vld [vmem:[#allocation16 + $0x100] sm:$0xff]
    %v1114 = vld [vmem:[#allocation16 + $0x108] sm:$0xff]
    %v1115 = vld [vmem:[#allocation16 + $0x110] sm:$0xff]
    %v1116 = vld [vmem:[#allocation16 + $0x118] sm:$0xff]
    %v1117 = vld [vmem:[#allocation16 + $0x120] sm:$0xff]
    %v1118 = vld [vmem:[#allocation16 + $0x128] sm:$0xff]
    %v1119 = vld [vmem:[#allocation16 + $0x130] sm:$0xff]
    %v1120 = vld [vmem:[#allocation16 + $0x138] sm:$0xff]
    %v1121 = vld [vmem:[#allocation16 + $0x140] sm:$0xff]
    %v1122 = vld [vmem:[#allocation16 + $0x148] sm:$0xff]
    %v1123 = vld [vmem:[#allocation16 + $0x150] sm:$0xff]
    %v1124 = vld [vmem:[#allocation16 + $0x158] sm:$0xff]
    %v1125 = vld [vmem:[#allocation16 + $0x160] sm:$0xff]
    %v1126 = vld [vmem:[#allocation16 + $0x168] sm:$0xff]
    %v1127 = vld [vmem:[#allocation16 + $0x170] sm:$0xff]
    %v1128 = vld [vmem:[#allocation16 + $0x178] sm:$0xff]
    %v1129 = vld [vmem:[#allocation16 + $0x180] sm:$0xff]
    %v1130 = vld [vmem:[#allocation16 + $0x188] sm:$0xff]
    %v1131 = vld [vmem:[#allocation16 + $0x190] sm:$0xff]
    %v1132 = vld [vmem:[#allocation16 + $0x198] sm:$0xff]
    %v1133 = vld [vmem:[#allocation16 + $0x1a0] sm:$0xff]
    %v1134 = vld [vmem:[#allocation16 + $0x1a8] sm:$0xff]
    %v1135 = vld [vmem:[#allocation16 + $0x1b0] sm:$0xff]
    %v1136 = vld [vmem:[#allocation16 + $0x1b8] sm:$0xff]
    %v1137 = vld [vmem:[#allocation16 + $0x1c0] sm:$0xff]
    %v1138 = vld [vmem:[#allocation16 + $0x1c8] sm:$0xff]
    %v1139 = vld [vmem:[#allocation16 + $0x1d0] sm:$0xff]
    %v1140 = vld [vmem:[#allocation16 + $0x1d8] sm:$0xff]
    %v1141 = vld [vmem:[#allocation16 + $0x1e0] sm:$0xff]
    %v1142 = vld [vmem:[#allocation16 + $0x1e8] sm:$0xff]
    %v1143 = vld [vmem:[#allocation16 + $0x1f0] sm:$0xff]
    %v1144 = vld [vmem:[#allocation16 + $0x1f8] sm:$0xff]
    %v1145 = vld [vmem:[#allocation16 + $0x200] sm:$0xff]
    %v1146 = vld [vmem:[#allocation16 + $0x208] sm:$0xff]
    %v1147 = vld [vmem:[#allocation16 + $0x210] sm:$0xff]
    %v1148 = vld [vmem:[#allocation16 + $0x218] sm:$0xff]
    %v1149 = vld [vmem:[#allocation16 + $0x220] sm:$0xff]
    %v1150 = vld [vmem:[#allocation16 + $0x228] sm:$0xff]
    %v1151 = vld [vmem:[#allocation16 + $0x230] sm:$0xff]
    %v1152 = vld [vmem:[#allocation16 + $0x238] sm:$0xff]
    %v1153 = vld [vmem:[#allocation16 + $0x240] sm:$0xff]
    %v1154 = vld [vmem:[#allocation16 + $0x248] sm:$0xff]
    %v1155 = vld [vmem:[#allocation16 + $0x250] sm:$0xff]
    %v1156 = vld [vmem:[#allocation16 + $0x258] sm:$0xff]
    %v1157 = vld [vmem:[#allocation16 + $0x260] sm:$0xff]
    %v1158 = vld [vmem:[#allocation16 + $0x268] sm:$0xff]
    %v1159 = vld [vmem:[#allocation16 + $0x270] sm:$0xff]
    %v1160 = vld [vmem:[#allocation16 + $0x278] sm:$0xff]
    %v1161 = vld [vmem:[#allocation16 + $0x280] sm:$0xff]
    %v1162 = vld [vmem:[#allocation16 + $0x288] sm:$0xff]
    %v1163 = vld [vmem:[#allocation16 + $0x290] sm:$0xff]
    %v1164 = vld [vmem:[#allocation16 + $0x298] sm:$0xff]
    %v1165 = vld [vmem:[#allocation16 + $0x2a0] sm:$0xff]
    %v1166 = vld [vmem:[#allocation16 + $0x2a8] sm:$0xff]
    %v1167 = vld [vmem:[#allocation16 + $0x2b0] sm:$0xff]
    %v1168 = vld [vmem:[#allocation16 + $0x2b8] sm:$0xff]
    %v1169 = vld [vmem:[#allocation16 + $0x2c0] sm:$0xff]
    %v1170 = vld [vmem:[#allocation16 + $0x2c8] sm:$0xff]
    %v1171 = vld [vmem:[#allocation16 + $0x2d0] sm:$0xff]
    %v1172 = vld [vmem:[#allocation16 + $0x2d8] sm:$0xff]
    %v1173 = vld [vmem:[#allocation16 + $0x2e0] sm:$0xff]
    %v1174 = vld [vmem:[#allocation16 + $0x2e8] sm:$0xff]
    %v1175 = vld [vmem:[#allocation16 + $0x2f0] sm:$0xff]
    %v1176 = vld [vmem:[#allocation16 + $0x2f8] sm:$0xff]
    %v1177 = vld [vmem:[#allocation16 + $0x300] sm:$0xff]
    %v1178 = vld [vmem:[#allocation16 + $0x308] sm:$0xff]
    %v1179 = vld [vmem:[#allocation16 + $0x310] sm:$0xff]
    %v1180 = vld [vmem:[#allocation16 + $0x318] sm:$0xff]
    %v1181 = vld [vmem:[#allocation16 + $0x320] sm:$0xff]
    %v1182 = vld [vmem:[#allocation16 + $0x328] sm:$0xff]
    %v1183 = vld [vmem:[#allocation16 + $0x330] sm:$0xff]
    %v1184 = vld [vmem:[#allocation16 + $0x338] sm:$0xff]
    %v1185 = vld [vmem:[#allocation16 + $0x340] sm:$0xff]
    %v1186 = vld [vmem:[#allocation16 + $0x348] sm:$0xff]
    %v1187 = vld [vmem:[#allocation16 + $0x350] sm:$0xff]
    %v1188 = vld [vmem:[#allocation16 + $0x358] sm:$0xff]
    %v1189 = vld [vmem:[#allocation16 + $0x360] sm:$0xff]
    %v1190 = vld [vmem:[#allocation16 + $0x368] sm:$0xff]
    %v1191 = vld [vmem:[#allocation16 + $0x370] sm:$0xff]
    %v1192 = vld [vmem:[#allocation16 + $0x378] sm:$0xff]
    %v1193 = vld [vmem:[#allocation16 + $0x380] sm:$0xff]
    %v1194 = vld [vmem:[#allocation16 + $0x388] sm:$0xff]
    %v1195 = vld [vmem:[#allocation16 + $0x390] sm:$0xff]
    %v1196 = vld [vmem:[#allocation16 + $0x398] sm:$0xff]
    %v1197 = vld [vmem:[#allocation16 + $0x3a0] sm:$0xff]
    %v1198 = vld [vmem:[#allocation16 + $0x3a8] sm:$0xff]
    %v1199 = vld [vmem:[#allocation16 + $0x3b0] sm:$0xff]
    %v1200 = vld [vmem:[#allocation16 + $0x3b8] sm:$0xff]
    %v1201 = vld [vmem:[#allocation16 + $0x3c0] sm:$0xff]
    %v1202 = vld [vmem:[#allocation16 + $0x3c8] sm:$0xff]
    %v1203 = vld [vmem:[#allocation16 + $0x3d0] sm:$0xff]
    %v1204 = vld [vmem:[#allocation16 + $0x3d8] sm:$0xff]
    %v1205 = vld [vmem:[#allocation16 + $0x3e0] sm:$0xff]
    %v1206 = vld [vmem:[#allocation16 + $0x3e8] sm:$0xff]
    %v1207 = vld [vmem:[#allocation16 + $0x3f0] sm:$0xff]
    %v1208 = vld [vmem:[#allocation16 + $0x3f8] sm:$0xff]
    %v1209 = vld [vmem:[%s24] sm:$0xff]
    %v1211 = vlaneseq
    %v1212 = vshrl.u32 %v1211, 7
    %v1213 = vsub.s32 0, %v1212
    %v1214 = vrot.slane %v1209, %v1213
    %v1215 = vlaneseq
    %v1216 = vshrl.u32 %v1215, 7
    %v1217 = vsub.s32 1, %v1216
    %v1218 = vrot.slane %v1209, %v1217
    %v1219 = vlaneseq
    %v1220 = vshrl.u32 %v1219, 7
    %v1221 = vsub.s32 2, %v1220
    %v1222 = vrot.slane %v1209, %v1221
    %v1223 = vlaneseq
    %v1224 = vshrl.u32 %v1223, 7
    %v1225 = vsub.s32 3, %v1224
    %v1226 = vrot.slane %v1209, %v1225
    %v1227 = vlaneseq
    %v1228 = vshrl.u32 %v1227, 7
    %v1229 = vsub.s32 4, %v1228
    %v1230 = vrot.slane %v1209, %v1229
    %v1231 = vlaneseq
    %v1232 = vshrl.u32 %v1231, 7
    %v1233 = vsub.s32 5, %v1232
    %v1234 = vrot.slane %v1209, %v1233
    %v1235 = vlaneseq
    %v1236 = vshrl.u32 %v1235, 7
    %v1237 = vsub.s32 6, %v1236
    %v1238 = vrot.slane %v1209, %v1237
    %v1239 = vlaneseq
    %v1240 = vshrl.u32 %v1239, 7
    %v1241 = vsub.s32 7, %v1240
    %v1242 = vrot.slane %v1209, %v1241
    %1251 = vmatprep.subr.mxu0 %v1202
    %1252 = vmatpush1.msra.mxu0 %v1201
    %1253 = vmatprep.subr.mxu0 %v1194
    %1254 = vmatpush1.msra.mxu0 %v1193
    %1255 = vmatprep.subr.mxu0 %v1186
    %1256 = vmatpush1.msra.mxu0 %v1185
    %1257 = vmatprep.subr.mxu0 %v1178
    %1258 = vmatpush1.msra.mxu0 %v1177
    %1259 = vmatprep.subr.mxu0 %v1170
    %1260 = vmatpush1.msra.mxu0 %v1169
    %1261 = vmatprep.subr.mxu0 %v1162
    %1262 = vmatpush1.msra.mxu0 %v1161
    %1263 = vmatprep.subr.mxu0 %v1154
    %1264 = vmatpush1.msra.mxu0 %v1153
    %1265 = vmatprep.subr.mxu0 %v1146
    %1266 = vmatpush1.msra.mxu0 %v1145
    %1267 = vmatprep.subr.mxu0 %v1138
    %1268 = vmatpush1.msra.mxu0 %v1137
    %1269 = vmatprep.subr.mxu0 %v1130
    %1270 = vmatpush1.msra.mxu0 %v1129
    %1271 = vmatprep.subr.mxu0 %v1122
    %1272 = vmatpush1.msra.mxu0 %v1121
    %1273 = vmatprep.subr.mxu0 %v1114
    %1274 = vmatpush1.msra.mxu0 %v1113
    %1275 = vmatprep.subr.mxu0 %v1106
    %1276 = vmatpush1.msra.mxu0 %v1105
    %1277 = vmatprep.subr.mxu0 %v1098
    %1278 = vmatpush1.msra.mxu0 %v1097
    %1279 = vmatprep.subr.mxu0 %v1090
    %1280 = vmatpush1.msra.mxu0 %v1089
    %1281 = vmatprep.subr.mxu0 %v1082
    %1282 = vmatpush1.msra.mxu0 %v1081
    %1283 = vmatprep.subr.mxu0 0.0
    %1284 = vmatpush2.msra.mxu0 0.0
    %1285 = vmatprep.subr.mxu0 0.0
    %1286 = vmatpush2.msra.mxu0 0.0
    %1287 = vmatprep.subr.mxu0 0.0
    %1288 = vmatpush2.msra.mxu0 0.0
    %1289 = vmatprep.subr.mxu0 0.0
    %1290 = vmatpush2.msra.mxu0 0.0
    %1291 = vmatprep.subr.mxu0 0.0
    %1292 = vmatpush2.msra.mxu0 0.0
    %1293 = vmatprep.subr.mxu0 0.0
    %1294 = vmatpush2.msra.mxu0 0.0
    %1295 = vmatprep.subr.mxu0 0.0
    %1296 = vmatpush2.msra.mxu0 0.0
    %1297 = vmatprep.subr.mxu0 0.0
    %1298 = vmatpush2.msra.mxu0 0.0
    %1299 = vmatprep.subr.mxu0 0.0
    %1300 = vmatpush2.msra.mxu0 0.0
    %1301 = vmatprep.subr.mxu0 0.0
    %1302 = vmatpush2.msra.mxu0 0.0
    %1303 = vmatprep.subr.mxu0 0.0
    %1304 = vmatpush2.msra.mxu0 0.0
    %1305 = vmatprep.subr.mxu0 0.0
    %1306 = vmatpush2.msra.mxu0 0.0
    %1307 = vmatprep.subr.mxu0 0.0
    %1308 = vmatpush2.msra.mxu0 0.0
    %1309 = vmatprep.subr.mxu0 0.0
    %1310 = vmatpush2.msra.mxu0 0.0
    %1311 = vmatprep.subr.mxu0 0.0
    %1312 = vmatpush2.msra.mxu0 0.0
    %1313 = vmatprep.subr.mxu0 0.0
    %1314 = vmatpush2.msra.mxu0 0.0
    %1315 = vmatprep.mubr.f32.mxu0 0.0
    %1316 = vmatmul.mubr.f32.gmra.mxu0 %v1080
    %v1317 = vpop.f32.mrf.mxu0
    %v1318 = vadd.f32 %v1214, %v1317
    %v1319 = vpop.f32.mrf.mxu0
    %v1320 = vadd.f32 %v1218, %v1319
    %1321 = vdwg.mxu0
    %1322 = vmatprep.subr.mxu0 %v1204
    %1323 = vmatpush1.msra.mxu0 %v1203
    %1324 = vmatprep.subr.mxu0 %v1196
    %1325 = vmatpush1.msra.mxu0 %v1195
    %1326 = vmatprep.subr.mxu0 %v1188
    %1327 = vmatpush1.msra.mxu0 %v1187
    %1328 = vmatprep.subr.mxu0 %v1180
    %1329 = vmatpush1.msra.mxu0 %v1179
    %1330 = vmatprep.subr.mxu0 %v1172
    %1331 = vmatpush1.msra.mxu0 %v1171
    %1332 = vmatprep.subr.mxu0 %v1164
    %1333 = vmatpush1.msra.mxu0 %v1163
    %1334 = vmatprep.subr.mxu0 %v1156
    %1335 = vmatpush1.msra.mxu0 %v1155
    %1336 = vmatprep.subr.mxu0 %v1148
    %1337 = vmatpush1.msra.mxu0 %v1147
    %1338 = vmatprep.subr.mxu0 %v1140
    %1339 = vmatpush1.msra.mxu0 %v1139
    %1340 = vmatprep.subr.mxu0 %v1132
    %1341 = vmatpush1.msra.mxu0 %v1131
    %1342 = vmatprep.subr.mxu0 %v1124
    %1343 = vmatpush1.msra.mxu0 %v1123
    %1344 = vmatprep.subr.mxu0 %v1116
    %1345 = vmatpush1.msra.mxu0 %v1115
    %1346 = vmatprep.subr.mxu0 %v1108
    %1347 = vmatpush1.msra.mxu0 %v1107
    %1348 = vmatprep.subr.mxu0 %v1100
    %1349 = vmatpush1.msra.mxu0 %v1099
    %1350 = vmatprep.subr.mxu0 %v1092
    %1351 = vmatpush1.msra.mxu0 %v1091
    %1352 = vmatprep.subr.mxu0 %v1084
    %1353 = vmatpush1.msra.mxu0 %v1083
    %1354 = vmatprep.subr.mxu0 0.0
    %1355 = vmatpush2.msra.mxu0 0.0
    %1356 = vmatprep.subr.mxu0 0.0
    %1357 = vmatpush2.msra.mxu0 0.0
    %1358 = vmatprep.subr.mxu0 0.0
    %1359 = vmatpush2.msra.mxu0 0.0
    %1360 = vmatprep.subr.mxu0 0.0
    %1361 = vmatpush2.msra.mxu0 0.0
    %1362 = vmatprep.subr.mxu0 0.0
    %1363 = vmatpush2.msra.mxu0 0.0
    %1364 = vmatprep.subr.mxu0 0.0
    %1365 = vmatpush2.msra.mxu0 0.0
    %1366 = vmatprep.subr.mxu0 0.0
    %1367 = vmatpush2.msra.mxu0 0.0
    %1368 = vmatprep.subr.mxu0 0.0
    %1369 = vmatpush2.msra.mxu0 0.0
    %1370 = vmatprep.subr.mxu0 0.0
    %1371 = vmatpush2.msra.mxu0 0.0
    %1372 = vmatprep.subr.mxu0 0.0
    %1373 = vmatpush2.msra.mxu0 0.0
    %1374 = vmatprep.subr.mxu0 0.0
    %1375 = vmatpush2.msra.mxu0 0.0
    %1376 = vmatprep.subr.mxu0 0.0
    %1377 = vmatpush2.msra.mxu0 0.0
    %1378 = vmatprep.subr.mxu0 0.0
    %1379 = vmatpush2.msra.mxu0 0.0
    %1380 = vmatprep.subr.mxu0 0.0
    %1381 = vmatpush2.msra.mxu0 0.0
    %1382 = vmatprep.subr.mxu0 0.0
    %1383 = vmatpush2.msra.mxu0 0.0
    %1384 = vmatprep.subr.mxu0 0.0
    %1385 = vmatpush2.msra.mxu0 0.0
    %1386 = vmatprep.mubr.f32.mxu0 0.0
    %1387 = vmatmul.mubr.f32.gmra.mxu0 %v1080
    %v1388 = vpop.f32.mrf.mxu0
    %v1389 = vadd.f32 %v1222, %v1388
    %v1390 = vpop.f32.mrf.mxu0
    %v1391 = vadd.f32 %v1226, %v1390
    %1392 = vdwg.mxu0
    %1393 = vmatprep.subr.mxu0 %v1206
    %1394 = vmatpush1.msra.mxu0 %v1205
    %1395 = vmatprep.subr.mxu0 %v1198
    %1396 = vmatpush1.msra.mxu0 %v1197
    %1397 = vmatprep.subr.mxu0 %v1190
    %1398 = vmatpush1.msra.mxu0 %v1189
    %1399 = vmatprep.subr.mxu0 %v1182
    %1400 = vmatpush1.msra.mxu0 %v1181
    %1401 = vmatprep.subr.mxu0 %v1174
    %1402 = vmatpush1.msra.mxu0 %v1173
    %1403 = vmatprep.subr.mxu0 %v1166
    %1404 = vmatpush1.msra.mxu0 %v1165
    %1405 = vmatprep.subr.mxu0 %v1158
    %1406 = vmatpush1.msra.mxu0 %v1157
    %1407 = vmatprep.subr.mxu0 %v1150
    %1408 = vmatpush1.msra.mxu0 %v1149
    %1409 = vmatprep.subr.mxu0 %v1142
    %1410 = vmatpush1.msra.mxu0 %v1141
    %1411 = vmatprep.subr.mxu0 %v1134
    %1412 = vmatpush1.msra.mxu0 %v1133
    %1413 = vmatprep.subr.mxu0 %v1126
    %1414 = vmatpush1.msra.mxu0 %v1125
    %1415 = vmatprep.subr.mxu0 %v1118
    %1416 = vmatpush1.msra.mxu0 %v1117
    %1417 = vmatprep.subr.mxu0 %v1110
    %1418 = vmatpush1.msra.mxu0 %v1109
    %1419 = vmatprep.subr.mxu0 %v1102
    %1420 = vmatpush1.msra.mxu0 %v1101
    %1421 = vmatprep.subr.mxu0 %v1094
    %1422 = vmatpush1.msra.mxu0 %v1093
    %1423 = vmatprep.subr.mxu0 %v1086
    %1424 = vmatpush1.msra.mxu0 %v1085
    %1425 = vmatprep.subr.mxu0 0.0
    %1426 = vmatpush2.msra.mxu0 0.0
    %1427 = vmatprep.subr.mxu0 0.0
    %1428 = vmatpush2.msra.mxu0 0.0
    %1429 = vmatprep.subr.mxu0 0.0
    %1430 = vmatpush2.msra.mxu0 0.0
    %1431 = vmatprep.subr.mxu0 0.0
    %1432 = vmatpush2.msra.mxu0 0.0
    %1433 = vmatprep.subr.mxu0 0.0
    %1434 = vmatpush2.msra.mxu0 0.0
    %1435 = vmatprep.subr.mxu0 0.0
    %1436 = vmatpush2.msra.mxu0 0.0
    %1437 = vmatprep.subr.mxu0 0.0
    %1438 = vmatpush2.msra.mxu0 0.0
    %1439 = vmatprep.subr.mxu0 0.0
    %1440 = vmatpush2.msra.mxu0 0.0
    %1441 = vmatprep.subr.mxu0 0.0
    %1442 = vmatpush2.msra.mxu0 0.0
    %1443 = vmatprep.subr.mxu0 0.0
    %1444 = vmatpush2.msra.mxu0 0.0
    %1445 = vmatprep.subr.mxu0 0.0
    %1446 = vmatpush2.msra.mxu0 0.0
    %1447 = vmatprep.subr.mxu0 0.0
    %1448 = vmatpush2.msra.mxu0 0.0
    %1449 = vmatprep.subr.mxu0 0.0
    %1450 = vmatpush2.msra.mxu0 0.0
    %1451 = vmatprep.subr.mxu0 0.0
    %1452 = vmatpush2.msra.mxu0 0.0
    %1453 = vmatprep.subr.mxu0 0.0
    %1454 = vmatpush2.msra.mxu0 0.0
    %1455 = vmatprep.subr.mxu0 0.0
    %1456 = vmatpush2.msra.mxu0 0.0
    %1457 = vmatprep.mubr.f32.mxu0 0.0
    %1458 = vmatmul.mubr.f32.gmra.mxu0 %v1080
    %v1459 = vpop.f32.mrf.mxu0
    %v1460 = vadd.f32 %v1230, %v1459
    %v1461 = vpop.f32.mrf.mxu0
    %v1462 = vadd.f32 %v1234, %v1461
    %1463 = vdwg.mxu0
    %1464 = vmatprep.subr.mxu0 %v1208
    %1465 = vmatpush1.msra.mxu0 %v1207
    %1466 = vmatprep.subr.mxu0 %v1200
    %1467 = vmatpush1.msra.mxu0 %v1199
    %1468 = vmatprep.subr.mxu0 %v1192
    %1469 = vmatpush1.msra.mxu0 %v1191
    %1470 = vmatprep.subr.mxu0 %v1184
    %1471 = vmatpush1.msra.mxu0 %v1183
    %1472 = vmatprep.subr.mxu0 %v1176
    %1473 = vmatpush1.msra.mxu0 %v1175
    %1474 = vmatprep.subr.mxu0 %v1168
    %1475 = vmatpush1.msra.mxu0 %v1167
    %1476 = vmatprep.subr.mxu0 %v1160
    %1477 = vmatpush1.msra.mxu0 %v1159
    %1478 = vmatprep.subr.mxu0 %v1152
    %1479 = vmatpush1.msra.mxu0 %v1151
    %1480 = vmatprep.subr.mxu0 %v1144
    %1481 = vmatpush1.msra.mxu0 %v1143
    %1482 = vmatprep.subr.mxu0 %v1136
    %1483 = vmatpush1.msra.mxu0 %v1135
    %1484 = vmatprep.subr.mxu0 %v1128
    %1485 = vmatpush1.msra.mxu0 %v1127
    %1486 = vmatprep.subr.mxu0 %v1120
    %1487 = vmatpush1.msra.mxu0 %v1119
    %1488 = vmatprep.subr.mxu0 %v1112
    %1489 = vmatpush1.msra.mxu0 %v1111
    %1490 = vmatprep.subr.mxu0 %v1104
    %1491 = vmatpush1.msra.mxu0 %v1103
    %1492 = vmatprep.subr.mxu0 %v1096
    %1493 = vmatpush1.msra.mxu0 %v1095
    %1494 = vmatprep.subr.mxu0 %v1088
    %1495 = vmatpush1.msra.mxu0 %v1087
    %1496 = vmatprep.subr.mxu0 0.0
    %1497 = vmatpush2.msra.mxu0 0.0
    %1498 = vmatprep.subr.mxu0 0.0
    %1499 = vmatpush2.msra.mxu0 0.0
    %1500 = vmatprep.subr.mxu0 0.0
    %1501 = vmatpush2.msra.mxu0 0.0
    %1502 = vmatprep.subr.mxu0 0.0
    %1503 = vmatpush2.msra.mxu0 0.0
    %1504 = vmatprep.subr.mxu0 0.0
    %1505 = vmatpush2.msra.mxu0 0.0
    %1506 = vmatprep.subr.mxu0 0.0
    %1507 = vmatpush2.msra.mxu0 0.0
    %1508 = vmatprep.subr.mxu0 0.0
    %1509 = vmatpush2.msra.mxu0 0.0
    %1510 = vmatprep.subr.mxu0 0.0
    %1511 = vmatpush2.msra.mxu0 0.0
    %1512 = vmatprep.subr.mxu0 0.0
    %1513 = vmatpush2.msra.mxu0 0.0
    %1514 = vmatprep.subr.mxu0 0.0
    %1515 = vmatpush2.msra.mxu0 0.0
    %1516 = vmatprep.subr.mxu0 0.0
    %1517 = vmatpush2.msra.mxu0 0.0
    %1518 = vmatprep.subr.mxu0 0.0
    %1519 = vmatpush2.msra.mxu0 0.0
    %1520 = vmatprep.subr.mxu0 0.0
    %1521 = vmatpush2.msra.mxu0 0.0
    %1522 = vmatprep.subr.mxu0 0.0
    %1523 = vmatpush2.msra.mxu0 0.0
    %1524 = vmatprep.subr.mxu0 0.0
    %1525 = vmatpush2.msra.mxu0 0.0
    %1526 = vmatprep.subr.mxu0 0.0
    %1527 = vmatpush2.msra.mxu0 0.0
    %1528 = vmatprep.mubr.f32.mxu0 0.0
    %1529 = vmatmul.mubr.f32.gmra.mxu0 %v1080
    %v1530 = vpop.f32.mrf.mxu0
    %v1531 = vadd.f32 %v1238, %v1530
    %v1532 = vpop.f32.mrf.mxu0
    %v1533 = vadd.f32 %v1242, %v1532
    %1534 = vdwg.mxu0
    %v1535 = vlaneseq
    %v1536 = vand.u32 %v1535, 127
    %v1537 = vadd.s32 %v1536, 128
    %v1538 = vadd.s32 %v1536, 256
    %v1539 = vadd.s32 %v1536, 384
    %v1540 = vadd.s32 %v1536, 512
    %v1541 = vadd.s32 %v1536, 640
    %v1542 = vadd.s32 %v1536, 768
    %v1543 = vadd.s32 %v1536, 896
    %vm1544 = vcmp.lt.s32.totalorder %v1536, 1000
    %vm1545 = vcmp.lt.s32.totalorder %v1537, 1000
    %vm1546 = vcmp.lt.s32.totalorder %v1538, 1000
    %vm1547 = vcmp.lt.s32.totalorder %v1539, 1000
    %vm1548 = vcmp.lt.s32.totalorder %v1540, 1000
    %vm1549 = vcmp.lt.s32.totalorder %v1541, 1000
    %vm1550 = vcmp.lt.s32.totalorder %v1542, 1000
    %vm1551 = vcmp.lt.s32.totalorder %v1543, 1000
    %v1552 = vsel %vm1544, %v1318, -1e+30
    %v1553 = vsel %vm1545, %v1320, -1e+30
    %v1554 = vsel %vm1546, %v1389, -1e+30
    %v1555 = vsel %vm1547, %v1391, -1e+30
    %v1556 = vsel %vm1548, %v1460, -1e+30
    %v1557 = vsel %vm1549, %v1462, -1e+30
    %v1558 = vsel %vm1550, %v1531, -1e+30
    %v1559 = vsel %vm1551, %v1533, -1e+30
    %v1560 = vmax.f32 %v1552, %v1556
    %v1561 = vmax.f32 %v1553, %v1557
    %v1562 = vmax.f32 %v1554, %v1558
    %v1563 = vmax.f32 %v1555, %v1559
    %v1564 = vmax.f32 %v1560, %v1561
    %v1565 = vmax.f32 %v1562, %v1563
    %v1566 = vmax.f32 %v1564, %v1565
    %1567 = vmax.xlane.f32.xlu0 %v1566
    %v1568 = vpop.xlane.xlu0 %1567
    %v1569 = vsub.f32 %v1552, %v1568
    %v1570 = vsub.f32 %v1553, %v1568
    %v1571 = vsub.f32 %v1554, %v1568
    %v1572 = vsub.f32 %v1555, %v1568
    %v1573 = vsub.f32 %v1556, %v1568
    %v1574 = vsub.f32 %v1557, %v1568
    %v1575 = vsub.f32 %v1558, %v1568
    %v1576 = vsub.f32 %v1559, %v1568
    %v1577 = vmul.f32 %v1569, 1.442695
    %v1578 = vpow.pop %v1577
    %v1579 = vmul.f32 %v1570, 1.442695
    %v1580 = vpow.pop %v1579
    %v1581 = vmul.f32 %v1571, 1.442695
    %v1582 = vpow.pop %v1581
    %v1583 = vmul.f32 %v1572, 1.442695
    %v1584 = vpow.pop %v1583
    %v1585 = vmul.f32 %v1573, 1.442695
    %v1586 = vpow.pop %v1585
    %v1587 = vmul.f32 %v1574, 1.442695
    %v1588 = vpow.pop %v1587
    %v1589 = vmul.f32 %v1575, 1.442695
    %v1590 = vpow.pop %v1589
    %v1591 = vmul.f32 %v1576, 1.442695
    %v1592 = vpow.pop %v1591
    %v1593 = vadd.f32 %v1578, %v1580
    %v1594 = vadd.f32 %v1593, %v1582
    %v1595 = vadd.f32 %v1594, %v1584
    %v1596 = vadd.f32 %v1595, %v1586
    %v1597 = vadd.f32 %v1596, %v1588
    %v1598 = vadd.f32 %v1597, %v1590
    %v1599 = vadd.f32 %v1598, %v1592
    %1600 = vadd.xlane.f32.xlu0 %v1599
    %v1601 = vpop.xlane.xlu0 %1600
    %v1602 = vlog2.pop %v1601
    %v1603 = vmul.f32 %v1602, 0.6931472
    %v1604 = vsub.f32 %v1569, %v1603
    %v1605 = vsub.f32 %v1570, %v1603
    %v1606 = vsub.f32 %v1571, %v1603
    %v1607 = vsub.f32 %v1572, %v1603
    %v1608 = vsub.f32 %v1573, %v1603
    %v1609 = vsub.f32 %v1574, %v1603
    %v1610 = vsub.f32 %v1575, %v1603
    %v1611 = vsub.f32 %v1576, %v1603
    %1612 = vst [vmem:[#allocation17] sm:$0xff] %v1604
    %1613 = vst [vmem:[#allocation17 + $0x8] sm:$0xff] %v1605
    %1614 = vst [vmem:[#allocation17 + $0x10] sm:$0xff] %v1606
    %1615 = vst [vmem:[#allocation17 + $0x18] sm:$0xff] %v1607
    %1616 = vst [vmem:[#allocation17 + $0x20] sm:$0xff] %v1608
    %1617 = vst [vmem:[#allocation17 + $0x28] sm:$0xff] %v1609
    %1618 = vst [vmem:[#allocation17 + $0x30] sm:$0xff] %v1610
    %1619 = vst [vmem:[#allocation17 + $0x38] sm:$0xff] %v1611
    // Predicated region
    $region138: #{tpu_custom_call.1} parent=1 // pred_check
      _
    $region139: #{tpu_custom_call.1} parent=1 // pred_check_branch
      %1621 = sbr.rel (0) target = $region141
    $region140: #{tpu_custom_call.1} parent=1 // pred_region
      %s1623 = ssub.s32 1024, 1024
      %1624 = vsyncadd [#allocation4], %s1623
      %s1626 = sshll.u32 [#allocation17], 4
      %s1627 = int_to_ptr.vmem [resolvable:$true] %s1626
      %1629 = dma.vmem_to_hbm [thread:$0]  %s1627, 1024, %s25, [#allocation4]
    $region141: #{tpu_custom_call.1} parent=1 // pred_fallthru
      _
    // Predicated region
    $region142: #{tpu_custom_call.1} parent=1 // pred_check
      _
    $region143: #{tpu_custom_call.1} parent=1 // pred_check_branch
      %1631 = sbr.rel (0) target = $region145
    $region144: #{tpu_custom_call.1} parent=1 // pred_region
      %1632 = dma.done [#allocation4], 1024
    $region145: #{tpu_custom_call.1} parent=1 // pred_fallthru
      _
    %1633 = vsyncpa [#allocation3], 1
    %1634 = vsyncpa [#allocation6], 1
    %1635 = vsyncpa [#allocation9], 1
    %1636 = vsyncpa [#allocation12], 1
    %1637 = vsyncpa [#allocation15], 1
    %1638 = vsyncpa [#allocation4], 1

</llo_original>
